<compile_context>
chip_gen: v7x
topology: tpu7x:2x2x1
jax: 0.10.0
libtpu: 0.0.40
codegen_flags: <defaults>
</compile_context>

<pallas_src>
import functools

import numpy as np
import jax
import jax.numpy as jnp
from jax import lax
from jax.experimental import pallas as pl
from jax.experimental.pallas import tpu as pltpu

NU = 1          # delay parameter nu (1-hop skip)
MAX_K = 2       # "Delay GNN for max K = 2"
LANE = 128      # TPU lane width


def get_k_neighbourhoods(t, max_k=MAX_K):
    return list(range(1, min(t + 1, max_k) + 1))


def _round_up(x, m):
    return ((x + m - 1) // m) * m


def _pad2d(x, rows, cols):
    return jnp.pad(x, ((0, rows - x.shape[0]), (0, cols - x.shape[1])))


# ---------------------------------------------------------------------------
# Fused stage kernel: grid = (num_layers, N//tm dst tiles, N//tk src tiles)
# ---------------------------------------------------------------------------
def _stage_kernel(x0_hbm, a1_ref, a2_ref, w_ref, out_ref,
                  xf_ref, xb_ref, acc_ref, *, n_pad, d_pad, tm, tk):
    t = pl.program_id(0)
    i = pl.program_id(1)
    k = pl.program_id(2)
    n_k = pl.num_programs(2)

    # One-time: stage x0 from HBM into f32 history slot 0 and its bf16 mirror.
    @pl.when((t == 0) & (i == 0) & (k == 0))
    def _():
        pltpu.sync_copy(x0_hbm, xf_ref.at[pl.ds(0, n_pad), :])

        @pl.loop(0, n_pad // tm)
        def _(r):
            rr = pl.multiple_of(r * tm, tm)
            xb_ref[pl.ds(rr, tm), :] = xf_ref[pl.ds(rr, tm), :].astype(
                jnp.bfloat16)

    # Rotating history slots.
    #   f32 residual history (2 slots): cur_f = x_t, nxt_f = x_{t+1}.
    #   bf16 message operand history (3 slots): prv_b = x_{t-1}, cur_b = x_t,
    #   nxt_b = x_{t+1}.  prv_b is only ever read when t > 0.
    cur_f = lax.rem(t, 2)
    nxt_f = lax.rem(t + 1, 2)
    cur_b = lax.rem(t, 3)
    nxt_b = lax.rem(t + 1, 3)
    prv_b = lax.rem(t + 2, 3)

    # --- k = 1 hop: A1 @ x_t accumulated into the left half of acc ----------
    cur_src = pl.multiple_of(cur_b * n_pad + k * tk, tk)
    a1 = a1_ref[...].astype(jnp.bfloat16)            # int8/bf16 -> bf16 (VPU)
    m1 = jnp.dot(a1, xb_ref[pl.ds(cur_src, tk), :],
                 preferred_element_type=jnp.float32)

    @pl.when(k == 0)
    def _():
        acc_ref[:, 0:d_pad] = m1                      # direct store, no zero-init

    @pl.when(k > 0)
    def _():
        acc_ref[:, 0:d_pad] += m1

    # Layer 0 has no k=2 hop: keep the right acc half defined (uninitialized
    # VMEM could be NaN and NaN * 0-weight = NaN in the finalize matmul).
    @pl.when((t == 0) & (k == 0))
    def _():
        acc_ref[:, d_pad:2 * d_pad] = jnp.zeros((tm, d_pad), jnp.float32)

    # --- k = 2 hop: A2 @ x_{t-1}, skipped entirely at t == 0 ----------------
    @pl.when(t > 0)
    def _():
        prv_src = pl.multiple_of(prv_b * n_pad + k * tk, tk)
        a2 = a2_ref[...].astype(jnp.bfloat16)
        m2 = jnp.dot(a2, xb_ref[pl.ds(prv_src, tk), :],
                     preferred_element_type=jnp.float32)

        @pl.when(k == 0)
        def _():
            acc_ref[:, d_pad:2 * d_pad] = m2

        @pl.when(k > 0)
        def _():
            acc_ref[:, d_pad:2 * d_pad] += m2

    # --- finalize this dst-row tile: fused stacked-weight matmul (bf16 MXU
    # operands, f32 accumulate), residual + ReLU, history + output writeback --
    @pl.when(k == n_k - 1)
    def _():
        h = jnp.dot(acc_ref[...].astype(jnp.bfloat16), w_ref[0],
                    preferred_element_type=jnp.float32)
        row = pl.multiple_of(i * tm, tm)
        x_row = xf_ref[pl.ds(cur_f * n_pad + row, tm), :]
        new_x = x_row + jnp.maximum(h, 0.0)
        xf_ref[pl.ds(nxt_f * n_pad + row, tm), :] = new_x
        xb_ref[pl.ds(nxt_b * n_pad + row, tm), :] = new_x.astype(jnp.bfloat16)
        out_ref[...] = new_x


# ---------------------------------------------------------------------------
# Wrapper helpers: VMEM budgeting, tile choice, adjacency quantization
# ---------------------------------------------------------------------------
def _physical_vmem_bytes():
    try:
        return int(pltpu.get_tpu_info().vmem_capacity_bytes)
    except Exception:
        return 64 << 20     # conservative default = v7x per-TensorCore VMEM


def _vmem_need_bytes(n_pad, d_pad, tm, tk, a_itemsize):
    return (2 * 2 * tm * tk * a_itemsize      # A1 + A2 tiles, double-buffered
            + 2 * 2 * d_pad * d_pad * 2       # stacked bf16 W_t (2 bufs)
            + 2 * tm * d_pad * 4              # output tile (2 bufs)
            + 2 * n_pad * d_pad * 4           # f32 residual history (2 slots)
            + 3 * n_pad * d_pad * 2           # bf16 message history (3 slots)
            + tm * 2 * d_pad * 4)             # message accumulator


def _choose_tile(n, d_pad, requested, a_itemsize, budget):
    tile = max(_round_up(int(min(requested, _round_up(n, LANE))), LANE), LANE)
    while tile > LANE:
        n_pad = _round_up(n, tile)
        if int(_vmem_need_bytes(n_pad, d_pad, tile, tile, a_itemsize) * 1.2) <= budget:
            return tile, n_pad
        tile -= LANE
    return LANE, _round_up(n, LANE)


def _prep_adjacency(a, n_pad):
    """Pad adjacency; store as int8 when entries are small integer counts
    (exact, halves the dominant HBM stream), else bf16."""
    a = _pad2d(a.astype(jnp.float32), n_pad, n_pad)
    try:
        int_ok = bool(jnp.all((a == jnp.round(a)) & (jnp.abs(a) <= 127.0)))
    except Exception:        # traced under jit -> cannot inspect values
        int_ok = False
    return a.astype(jnp.int8) if int_ok else a.astype(jnp.bfloat16)


# ---------------------------------------------------------------------------
# Wrapper: padding, weight stacking, pallas_call
# ---------------------------------------------------------------------------
def delay_gnn_stage_forward(params, x0, a_by_k, num_layers, *, tile=1024):
    n, d = x0.shape
    num_layers = int(num_layers)
    d_pad = _round_up(max(d, LANE), LANE)

    physical_vmem = _physical_vmem_bytes()
    tm, n_pad = _choose_tile(n, d_pad, tile, 1, int(physical_vmem * 0.9))
    tk = tm
    n_i = n_pad // tm
    n_k = n_pad // tk

    x0_p = _pad2d(x0.astype(jnp.float32), n_pad, d_pad)
    a1_p = _prep_adjacency(a_by_k[1], n_pad)
    a2_p = _prep_adjacency(a_by_k[2], n_pad)
    a_itemsize = max(a1_p.dtype.itemsize, a2_p.dtype.itemsize)

    # Pre-scale and stack per-layer hop weights: [alpha1*W1 ; alpha2*W2] of
    # shape (2*d_pad, d_pad), bf16 (layer 0 has no k=2 hop -> zero W2 half).
    w_stack = []
    for t in range(num_layers):
        khoods = get_k_neighbourhoods(t)
        alpha = jax.nn.softmax(params["alpha_t"][t].astype(jnp.float32))
        w1 = params["W_kt"]["k=1, t=%d" % t].astype(jnp.float32)
        w1s = _pad2d(alpha[0] * w1, d_pad, d_pad)
        if len(khoods) > 1:
            w2 = params["W_kt"]["k=2, t=%d" % t].astype(jnp.float32)
            w2s = _pad2d(alpha[1] * w2, d_pad, d_pad)
        else:
            w2s = jnp.zeros((d_pad, d_pad), jnp.float32)
        w_stack.append(jnp.concatenate([w1s, w2s], axis=0))
    w_stack = jnp.stack(w_stack, axis=0).astype(jnp.bfloat16)

    kernel = functools.partial(_stage_kernel, n_pad=n_pad, d_pad=d_pad,
                               tm=tm, tk=tk)

    need = _vmem_need_bytes(n_pad, d_pad, tm, tk, a_itemsize)
    vmem_limit = min(physical_vmem, max(int(need * 1.4) + (4 << 20), 16 << 20))

    out = pl.pallas_call(
        kernel,
        out_shape=jax.ShapeDtypeStruct((n_pad, d_pad), jnp.float32),
        grid_spec=pltpu.PrefetchScalarGridSpec(
            num_scalar_prefetch=0,
            grid=(num_layers, n_i, n_k),
            in_specs=[
                # x0 stays in HBM; copied once into the history scratch.
                pl.BlockSpec(memory_space=pl.ANY),
                # A1: streamed (tm, tk) int8/bf16 tiles (auto double-buffered).
                pl.BlockSpec((tm, tk), lambda t, i, k: (i, k)),
                # A2: same, but pinned to block (0,0) at t == 0 so the useless
                # layer-0 stream is never DMA'd.
                pl.BlockSpec((tm, tk),
                             lambda t, i, k: (jnp.where(t == 0, 0, i),
                                              jnp.where(t == 0, 0, k))),
                # per-layer stacked, alpha-pre-scaled bf16 weights.
                pl.BlockSpec((1, 2 * d_pad, d_pad), lambda t, i, k: (t, 0, 0)),
            ],
            out_specs=pl.BlockSpec((tm, d_pad), lambda t, i, k: (i, 0)),
            scratch_shapes=[
                pltpu.VMEM((2 * n_pad, d_pad), jnp.float32),    # x_t / x_{t+1}
                pltpu.VMEM((3 * n_pad, d_pad), jnp.bfloat16),   # bf16 x mirror
                pltpu.VMEM((tm, 2 * d_pad), jnp.float32),       # [A1@x_t|A2@x_{t-1}]
            ],
        ),
        compiler_params=pltpu.CompilerParams(
            # Every layer reads ALL rows of the previous layer through the
            # VMEM-resident history -> grid must execute sequentially.
            dimension_semantics=("arbitrary", "arbitrary", "arbitrary"),
            vmem_limit_bytes=vmem_limit,
        ),
    )(x0_p, a1_p, a2_p, w_stack)
    return out[:n, :d]


# ---------------------------------------------------------------------------
# Parameter init, pure-JAX reference, adjacency helper
# ---------------------------------------------------------------------------
def init_delay_gnn_stage(key, dim, num_layers):
    """W_kt['k=%d, t=%d'] : (dim, dim); alpha_t[t] : (len(k_hoods),)."""
    params = {"W_kt": {}, "alpha_t": []}
    for t in range(num_layers):
        khoods = get_k_neighbourhoods(t)
        for k in khoods:
            key, sub = jax.random.split(key)
            params["W_kt"]["k=%d, t=%d" % (k, t)] = (
                jax.random.normal(sub, (dim, dim), jnp.float32) / np.sqrt(dim))
        key, sub = jax.random.split(key)
        params["alpha_t"].append(
            jax.random.normal(sub, (len(khoods),), jnp.float32) * 0.1)
    return params


def delay_gnn_stage_reference(params, x0, a_by_k, num_layers):
    xs, x = [], x0.astype(jnp.float32)
    for t in range(num_layers):
        xs.append(x)
        khoods = get_k_neighbourhoods(t)
        alpha = jax.nn.softmax(params["alpha_t"][t].astype(jnp.float32))
        h = jnp.zeros_like(x)
        for idx, k in enumerate(khoods):
            delay = max(k - NU, 0)
            w = params["W_kt"]["k=%d, t=%d" % (k, t)]
            h = h + alpha[idx] * (a_by_k[k] @ xs[t - delay]) @ w
        x = x + jnp.maximum(h, 0.0)
    return x


def dense_adjacency(edge_index, edge_attr, num_nodes, k):
    mask = (edge_attr == k).astype(jnp.float32)
    a = jnp.zeros((num_nodes, num_nodes), jnp.float32)
    # A[dst, src] += 1 for edges at hop distance k
    return a.at[edge_index[1], edge_index[0]].add(mask)
    # TODO(synk): the original W(t) conv (truncated in the reference) may apply
    # GCN degree normalization; plain sum aggregation is used here.


if __name__ == "__main__":
    key = jax.random.PRNGKey(0)
    N, D = 200, 32           # nodes, hidden dim (exercises row + lane padding)
    num_layers = 3
    E = 1024                 # number of (multi-hop) edges

    k_x, k_ei, k_ea, k_p = jax.random.split(key, 4)
    x0 = jax.random.normal(k_x, (N, D), jnp.float32)
    edge_index = jax.random.randint(k_ei, (2, E), 0, N, jnp.int32)
    edge_attr = jax.random.randint(k_ea, (E,), 1, MAX_K + 1, jnp.int32)

    a_by_k = {k: dense_adjacency(edge_index, edge_attr, N, k)
              for k in range(1, MAX_K + 1)}
    params = init_delay_gnn_stage(k_p, D, num_layers)

    # tile=128 -> padded N=256, grid (layers=3, 2 row tiles, 2 src tiles):
    # exercises accumulation, finalize, layer ping-pong and the t==0 A2 skip.
    out = delay_gnn_stage_forward(params, x0, a_by_k, num_layers, tile=128)
    out = jax.block_until_ready(out)

    ref = delay_gnn_stage_reference(params, x0, a_by_k, num_layers)
    err = float(jnp.max(jnp.abs(out - ref)))
    scale = float(jnp.max(jnp.abs(ref))) + 1.0
    assert err < 2e-2 * scale, f"mismatch: max abs err {err} (scale {scale})"

    print("KERNEL_OK")
</pallas_src>

<mosaic_0001>
module attributes {stable_mosaic.version = 11 : i64} {
  func.func @_stage_kernel(%arg0: i32, %arg1: i32, %arg2: i32, %arg3: memref<256x128xf32, #tpu.memory_space<any>>, %arg4: memref<128x128xi8, #tpu.memory_space<vmem>>, %arg5: memref<128x128xi8, #tpu.memory_space<vmem>>, %arg6: memref<1x256x128xbf16, #tpu.memory_space<vmem>>, %arg7: memref<128x128xf32, #tpu.memory_space<vmem>>, %arg8: memref<512x128xf32, #tpu.memory_space<vmem>>, %arg9: memref<768x128xbf16, #tpu.memory_space<vmem>>, %arg10: memref<128x256xf32, #tpu.memory_space<vmem>>) attributes {dimension_semantics = [#tpu.dimension_semantics<arbitrary>, #tpu.dimension_semantics<arbitrary>, #tpu.dimension_semantics<arbitrary>], iteration_bounds = array<i64: 3, 2, 2>, scalar_prefetch = 0 : i64, scratch_operands = 3 : i64, tpu.core_type = #tpu.core_type<tc>, window_params = [{}, {transform_indices = @transform_1, window_bounds = array<i64: 128, 128>}, {transform_indices = @transform_2, window_bounds = array<i64: 128, 128>}, {transform_indices = @transform_3, window_bounds = array<i64: 1, 256, 128>}, {transform_indices = @transform_4, window_bounds = array<i64: 128, 128>}]} {
    %c0_i32 = arith.constant 0 : i32
    %0 = arith.cmpi eq, %arg0, %c0_i32 : i32
    %c0_i32_0 = arith.constant 0 : i32
    %1 = arith.cmpi eq, %arg1, %c0_i32_0 : i32
    %2 = arith.andi %0, %1 : i1
    %c0_i32_1 = arith.constant 0 : i32
    %3 = arith.cmpi eq, %arg2, %c0_i32_1 : i32
    %4 = arith.andi %2, %3 : i1
    %5 = arith.extui %4 : i1 to i32
    %c0_i32_2 = arith.constant 0 : i32
    %6 = arith.cmpi ne, %5, %c0_i32_2 : i32
    scf.if %6 {
      "tpu.region"() ({
        %42 = tpu.sem_alloc : memref<!tpu.dma_semaphore, #tpu.memory_space<semaphore_mem>>
        %c0_i32_25 = arith.constant 0 : i32
        %c0_i32_26 = arith.constant 0 : i32
        %43 = tpu.memref_slice %arg8[%c0_i32_25, %c0_i32_26] : memref<512x128xf32, #tpu.memory_space<vmem>> -> memref<256x128xf32, #tpu.memory_space<vmem>>
        tpu.enqueue_dma source(%arg3 : memref<256x128xf32, #tpu.memory_space<any>>) target(%43 : memref<256x128xf32, #tpu.memory_space<vmem>>) target_semaphore(%42 : memref<!tpu.dma_semaphore, #tpu.memory_space<semaphore_mem>>)
        %c0_i32_27 = arith.constant 0 : i32
        %c0_i32_28 = arith.constant 0 : i32
        %44 = tpu.memref_slice %arg8[%c0_i32_27, %c0_i32_28] : memref<512x128xf32, #tpu.memory_space<vmem>> -> memref<256x128xf32, #tpu.memory_space<vmem>>
        tpu.wait_dma2 semaphore(%42 : memref<!tpu.dma_semaphore, #tpu.memory_space<semaphore_mem>>) src(%arg3 : memref<256x128xf32, #tpu.memory_space<any>>) dst(%44 : memref<256x128xf32, #tpu.memory_space<vmem>>)
        tpu.yield
      }) : () -> ()
      %c0_i32_21 = arith.constant 0 : i32
      %c2_i32_22 = arith.constant 2 : i32
      %41 = arith.addi %c0_i32_21, %c2_i32_22 : i32
      %c1_i32_23 = arith.constant 1 : i32
      scf.for %arg11 = %c0_i32_21 to %41 step %c1_i32_23  : i32 {
        %c1_i32_25 = arith.constant 1 : i32
        %42 = arith.muli %arg11, %c1_i32_25 : i32
        %c0_i32_26 = arith.constant 0 : i32
        %43 = arith.addi %c0_i32_26, %42 : i32
        %c128_i32_27 = arith.constant 128 : i32
        %44 = arith.muli %43, %c128_i32_27 : i32
        %45 = tpu.assume_multiple %44, 128 : i32
        %46 = arith.index_cast %45 : i32 to index
        %c0_28 = arith.constant 0 : index
        %47 = vector.load %arg8[%46, %c0_28] : memref<512x128xf32, #tpu.memory_space<vmem>>, vector<128x128xf32>
        %48 = arith.truncf %47 : vector<128x128xf32> to vector<128x128xbf16>
        %49 = arith.index_cast %45 : i32 to index
        %c0_29 = arith.constant 0 : index
        %50 = vector.load %arg9[%49, %c0_29] : memref<768x128xbf16, #tpu.memory_space<vmem>>, vector<128x128xbf16>
        tpu.vector_store %arg9[%49, %c0_29], %48 {strides = array<i32>} : memref<768x128xbf16, #tpu.memory_space<vmem>>, vector<128x128xbf16>,
      }
      %c2_i32_24 = arith.constant 2 : i32
    } else {
    }
    %c2_i32 = arith.constant 2 : i32
    %7 = arith.remsi %arg0, %c2_i32 : i32
    %c1_i32 = arith.constant 1 : i32
    %8 = arith.addi %arg0, %c1_i32 : i32
    %c2_i32_3 = arith.constant 2 : i32
    %9 = arith.remsi %8, %c2_i32_3 : i32
    %c3_i32 = arith.constant 3 : i32
    %10 = arith.remsi %arg0, %c3_i32 : i32
    %c1_i32_4 = arith.constant 1 : i32
    %11 = arith.addi %arg0, %c1_i32_4 : i32
    %c3_i32_5 = arith.constant 3 : i32
    %12 = arith.remsi %11, %c3_i32_5 : i32
    %c2_i32_6 = arith.constant 2 : i32
    %13 = arith.addi %arg0, %c2_i32_6 : i32
    %c3_i32_7 = arith.constant 3 : i32
    %14 = arith.remsi %13, %c3_i32_7 : i32
    %c256_i32 = arith.constant 256 : i32
    %15 = arith.muli %10, %c256_i32 : i32
    %c128_i32 = arith.constant 128 : i32
    %16 = arith.muli %arg2, %c128_i32 : i32
    %17 = arith.addi %15, %16 : i32
    %18 = tpu.assume_multiple %17, 128 : i32
    %c0 = arith.constant 0 : index
    %c0_8 = arith.constant 0 : index
    %19 = vector.load %arg4[%c0, %c0_8] : memref<128x128xi8, #tpu.memory_space<vmem>>, vector<128x128xi8>
    %20 = arith.sitofp %19 : vector<128x128xi8> to vector<128x128xbf16>
    %21 = arith.index_cast %18 : i32 to index
    %c0_9 = arith.constant 0 : index
    %22 = vector.load %arg9[%21, %c0_9] : memref<768x128xbf16, #tpu.memory_space<vmem>>, vector<128x128xbf16>
    %cst = arith.constant dense<0.000000e+00> : vector<128x128xf32>
    %23 = tpu.matmul %20, %22, %cst {dimension_numbers = #tpu.dot_dimension_numbers<[1], [0], [0], [1], [0, 0, 1, 1], [], []>} : vector<128x128xbf16>, vector<128x128xbf16>, vector<128x128xf32> -> vector<128x128xf32>
    %c0_i32_10 = arith.constant 0 : i32
    %24 = arith.cmpi eq, %arg2, %c0_i32_10 : i32
    %25 = arith.extui %24 : i1 to i32
    %c0_i32_11 = arith.constant 0 : i32
    %26 = arith.cmpi ne, %25, %c0_i32_11 : i32
    scf.if %26 {
      %c0_21 = arith.constant 0 : index
      %c0_22 = arith.constant 0 : index
      %41 = vector.load %arg10[%c0_21, %c0_22] : memref<128x256xf32, #tpu.memory_space<vmem>>, vector<128x128xf32>
      tpu.vector_store %arg10[%c0_21, %c0_22], %23 {strides = array<i32>} : memref<128x256xf32, #tpu.memory_space<vmem>>, vector<128x128xf32>,
    } else {
    }
    %c0_i32_12 = arith.constant 0 : i32
    %27 = arith.cmpi sgt, %arg2, %c0_i32_12 : i32
    %28 = arith.extui %27 : i1 to i32
    %c0_i32_13 = arith.constant 0 : i32
    %29 = arith.cmpi ne, %28, %c0_i32_13 : i32
    scf.if %29 {
      %c0_21 = arith.constant 0 : index
      %c0_22 = arith.constant 0 : index
      %41 = vector.load %arg10[%c0_21, %c0_22] : memref<128x256xf32, #tpu.memory_space<vmem>>, vector<128x128xf32>
      %42 = arith.addf %41, %23 : vector<128x128xf32>
      %c0_23 = arith.constant 0 : index
      %c0_24 = arith.constant 0 : index
      %43 = vector.load %arg10[%c0_23, %c0_24] : memref<128x256xf32, #tpu.memory_space<vmem>>, vector<128x128xf32>
      tpu.vector_store %arg10[%c0_23, %c0_24], %42 {strides = array<i32>} : memref<128x256xf32, #tpu.memory_space<vmem>>, vector<128x128xf32>,
    } else {
    }
    %c0_i32_14 = arith.constant 0 : i32
    %30 = arith.cmpi eq, %arg0, %c0_i32_14 : i32
    %c0_i32_15 = arith.constant 0 : i32
    %31 = arith.cmpi eq, %arg2, %c0_i32_15 : i32
    %32 = arith.andi %30, %31 : i1
    %33 = arith.extui %32 : i1 to i32
    %c0_i32_16 = arith.constant 0 : i32
    %34 = arith.cmpi ne, %33, %c0_i32_16 : i32
    scf.if %34 {
      %cst_21 = arith.constant 0.000000e+00 : f32
      %41 = vector.broadcast %cst_21 : f32 to vector<128x128xf32>
      %c0_22 = arith.constant 0 : index
      %c128 = arith.constant 128 : index
      %42 = vector.load %arg10[%c0_22, %c128] : memref<128x256xf32, #tpu.memory_space<vmem>>, vector<128x128xf32>
      tpu.vector_store %arg10[%c0_22, %c128], %41 {strides = array<i32>} : memref<128x256xf32, #tpu.memory_space<vmem>>, vector<128x128xf32>,
    } else {
    }
    %c0_i32_17 = arith.constant 0 : i32
    %35 = arith.cmpi sgt, %arg0, %c0_i32_17 : i32
    %36 = arith.extui %35 : i1 to i32
    %c0_i32_18 = arith.constant 0 : i32
    %37 = arith.cmpi ne, %36, %c0_i32_18 : i32
    scf.if %37 {
      %c256_i32_21 = arith.constant 256 : i32
      %41 = arith.muli %14, %c256_i32_21 : i32
      %c128_i32_22 = arith.constant 128 : i32
      %42 = arith.muli %arg2, %c128_i32_22 : i32
      %43 = arith.addi %41, %42 : i32
      %44 = tpu.assume_multiple %43, 128 : i32
      %c0_23 = arith.constant 0 : index
      %c0_24 = arith.constant 0 : index
      %45 = vector.load %arg5[%c0_23, %c0_24] : memref<128x128xi8, #tpu.memory_space<vmem>>, vector<128x128xi8>
      %46 = arith.sitofp %45 : vector<128x128xi8> to vector<128x128xbf16>
      %47 = arith.index_cast %44 : i32 to index
      %c0_25 = arith.constant 0 : index
      %48 = vector.load %arg9[%47, %c0_25] : memref<768x128xbf16, #tpu.memory_space<vmem>>, vector<128x128xbf16>
      %cst_26 = arith.constant dense<0.000000e+00> : vector<128x128xf32>
      %49 = tpu.matmul %46, %48, %cst_26 {dimension_numbers = #tpu.dot_dimension_numbers<[1], [0], [0], [1], [0, 0, 1, 1], [], []>} : vector<128x128xbf16>, vector<128x128xbf16>, vector<128x128xf32> -> vector<128x128xf32>
      %c0_i32_27 = arith.constant 0 : i32
      %50 = arith.cmpi eq, %arg2, %c0_i32_27 : i32
      %51 = arith.extui %50 : i1 to i32
      %c0_i32_28 = arith.constant 0 : i32
      %52 = arith.cmpi ne, %51, %c0_i32_28 : i32
      scf.if %52 {
        %c0_31 = arith.constant 0 : index
        %c128 = arith.constant 128 : index
        %56 = vector.load %arg10[%c0_31, %c128] : memref<128x256xf32, #tpu.memory_space<vmem>>, vector<128x128xf32>
        tpu.vector_store %arg10[%c0_31, %c128], %49 {strides = array<i32>} : memref<128x256xf32, #tpu.memory_space<vmem>>, vector<128x128xf32>,
      } else {
      }
      %c0_i32_29 = arith.constant 0 : i32
      %53 = arith.cmpi sgt, %arg2, %c0_i32_29 : i32
      %54 = arith.extui %53 : i1 to i32
      %c0_i32_30 = arith.constant 0 : i32
      %55 = arith.cmpi ne, %54, %c0_i32_30 : i32
      scf.if %55 {
        %c0_31 = arith.constant 0 : index
        %c128 = arith.constant 128 : index
        %56 = vector.load %arg10[%c0_31, %c128] : memref<128x256xf32, #tpu.memory_space<vmem>>, vector<128x128xf32>
        %57 = arith.addf %56, %49 : vector<128x128xf32>
        %c0_32 = arith.constant 0 : index
        %c128_33 = arith.constant 128 : index
        %58 = vector.load %arg10[%c0_32, %c128_33] : memref<128x256xf32, #tpu.memory_space<vmem>>, vector<128x128xf32>
        tpu.vector_store %arg10[%c0_32, %c128_33], %57 {strides = array<i32>} : memref<128x256xf32, #tpu.memory_space<vmem>>, vector<128x128xf32>,
      } else {
      }
    } else {
    }
    %c1_i32_19 = arith.constant 1 : i32
    %38 = arith.cmpi eq, %arg2, %c1_i32_19 : i32
    %39 = arith.extui %38 : i1 to i32
    %c0_i32_20 = arith.constant 0 : i32
    %40 = arith.cmpi ne, %39, %c0_i32_20 : i32
    scf.if %40 {
      %c0_21 = arith.constant 0 : index
      %c0_22 = arith.constant 0 : index
      %41 = vector.load %arg10[%c0_21, %c0_22] : memref<128x256xf32, #tpu.memory_space<vmem>>, vector<128x256xf32>
      %42 = arith.truncf %41 : vector<128x256xf32> to vector<128x256xbf16>
      %c0_23 = arith.constant 0 : index
      %c0_24 = arith.constant 0 : index
      %c0_25 = arith.constant 0 : index
      %43 = vector.load %arg6[%c0_23, %c0_24, %c0_25] : memref<1x256x128xbf16, #tpu.memory_space<vmem>>, vector<1x256x128xbf16>
      %44 = vector.shape_cast %43 : vector<1x256x128xbf16> to vector<256x128xbf16>
      %cst_26 = arith.constant dense<0.000000e+00> : vector<128x128xf32>
      %45 = tpu.matmul %42, %44, %cst_26 {dimension_numbers = #tpu.dot_dimension_numbers<[1], [0], [0], [1], [0, 0, 1, 1], [], []>} : vector<128x256xbf16>, vector<256x128xbf16>, vector<128x128xf32> -> vector<128x128xf32>
      %c128_i32_27 = arith.constant 128 : i32
      %46 = arith.muli %arg1, %c128_i32_27 : i32
      %47 = tpu.assume_multiple %46, 128 : i32
      %c256_i32_28 = arith.constant 256 : i32
      %48 = arith.muli %7, %c256_i32_28 : i32
      %49 = arith.addi %48, %47 : i32
      %50 = arith.index_cast %49 : i32 to index
      %c0_29 = arith.constant 0 : index
      %51 = vector.load %arg8[%50, %c0_29] : memref<512x128xf32, #tpu.memory_space<vmem>>, vector<128x128xf32>
      %cst_30 = arith.constant 0.000000e+00 : f32
      %52 = vector.broadcast %cst_30 : f32 to vector<128x128xf32>
      %53 = arith.maximumf %45, %52 : vector<128x128xf32>
      %54 = arith.addf %51, %53 : vector<128x128xf32>
      %c256_i32_31 = arith.constant 256 : i32
      %55 = arith.muli %9, %c256_i32_31 : i32
      %56 = arith.addi %55, %47 : i32
      %57 = arith.index_cast %56 : i32 to index
      %c0_32 = arith.constant 0 : index
      %58 = vector.load %arg8[%57, %c0_32] : memref<512x128xf32, #tpu.memory_space<vmem>>, vector<128x128xf32>
      tpu.vector_store %arg8[%57, %c0_32], %54 {strides = array<i32>} : memref<512x128xf32, #tpu.memory_space<vmem>>, vector<128x128xf32>,
      %59 = arith.truncf %54 : vector<128x128xf32> to vector<128x128xbf16>
      %c256_i32_33 = arith.constant 256 : i32
      %60 = arith.muli %12, %c256_i32_33 : i32
      %61 = arith.addi %60, %47 : i32
      %62 = arith.index_cast %61 : i32 to index
      %c0_34 = arith.constant 0 : index
      %63 = vector.load %arg9[%62, %c0_34] : memref<768x128xbf16, #tpu.memory_space<vmem>>, vector<128x128xbf16>
      tpu.vector_store %arg9[%62, %c0_34], %59 {strides = array<i32>} : memref<768x128xbf16, #tpu.memory_space<vmem>>, vector<128x128xbf16>,
      %c0_35 = arith.constant 0 : index
      %c0_36 = arith.constant 0 : index
      %64 = vector.load %arg7[%c0_35, %c0_36] : memref<128x128xf32, #tpu.memory_space<vmem>>, vector<128x128xf32>
      tpu.vector_store %arg7[%c0_35, %c0_36], %54 {strides = array<i32>} : memref<128x128xf32, #tpu.memory_space<vmem>>, vector<128x128xf32>,
    } else {
    }
    return
  }
  func.func @transform_1(%arg0: i32, %arg1: i32, %arg2: i32) -> (i32, i32) {
    %c0_i32 = arith.constant 0 : i32
    return %arg1, %arg2 : i32, i32
  }
  func.func @transform_2(%arg0: i32, %arg1: i32, %arg2: i32) -> (i32, i32) {
    %c0_i32 = arith.constant 0 : i32
    %0 = arith.cmpi eq, %arg0, %c0_i32 : i32
    %c0_i32_0 = arith.constant 0 : i32
    %1 = arith.select %0, %c0_i32_0, %arg1 : i32
    %c0_i32_1 = arith.constant 0 : i32
    %2 = arith.cmpi eq, %arg0, %c0_i32_1 : i32
    %c0_i32_2 = arith.constant 0 : i32
    %3 = arith.select %2, %c0_i32_2, %arg2 : i32
    %c0_i32_3 = arith.constant 0 : i32
    return %1, %3 : i32, i32
  }
  func.func @transform_3(%arg0: i32, %arg1: i32, %arg2: i32) -> (i32, i32, i32) {
    %c0_i32 = arith.constant 0 : i32
    %c0_i32_0 = arith.constant 0 : i32
    %c0_i32_1 = arith.constant 0 : i32
    return %arg0, %c0_i32, %c0_i32_0 : i32, i32, i32
  }
  func.func @transform_4(%arg0: i32, %arg1: i32, %arg2: i32) -> (i32, i32) {
    %c0_i32 = arith.constant 0 : i32
    %c0_i32_0 = arith.constant 0 : i32
    return %arg1, %c0_i32 : i32, i32
  }
}

</mosaic_0001>

<llo_original>
// kernel: tpu_custom_call.1
$region0: #{tpu_custom_call.1}
  #allocation0 [shape = 'u32[]', space=smem, size = 0x4, offset = 0x4, fixed_abs, tag = 'smem constant byte address 0x4 - core index']
  #allocation1 [shape = 'u32[144,128]{1,0:T(1,128)}', space=vmem, size = 0x12000, scoped, tag = 'internal scratch']
  #allocation2 [shape = 'f32[512,128]{1,0:T(8,128)}', space=vmem, size = 0x40000, scoped, tag = 'scratch operand']
  #allocation3 [shape = 'bf16[768,128]{1,0:T(16,128)(2,1)}', space=vmem, size = 0x30000, scoped, tag = 'scratch operand']
  #allocation4 [shape = 'f32[128,256]{1,0:T(8,128)}', space=vmem, size = 0x20000, scoped, tag = 'scratch operand']
  #allocation13 [shape = 's32[]', space=sflag, size = 0x4, offset = 0, fixed_abs, tag = 'sflag constant byte address 0x0 - dummy sync flag']
  #allocation14 [shape = 's32[]', space=sflag, size = 0x4, offset = 0, fixed_abs, tag = 'sflag constant byte address 0x0 - dummy sync flag']
  #allocation15 [shape = 'u32[]', space=smem, size = 0x4, offset = 0x44, fixed_abs, tag = 'smem constant byte address 0x44 - assertion arg 0']
  #allocation16 [shape = 'u32[]', space=smem, size = 0x4, offset = 0x48, fixed_abs, tag = 'smem constant byte address 0x48 - assertion arg 1']
  %s0 = inlined_call_operand.hbm [shape: f32[256,128], index: 0, kind: input, shape index: {}]
  %s1 = inlined_call_operand.hbm [shape: s8[256,256], index: 1, kind: input, shape index: {}]
  %s2 = inlined_call_operand.hbm [shape: s8[256,256], index: 2, kind: input, shape index: {}]
  %s3 = inlined_call_operand.hbm [shape: bf16[3,256,128], index: 3, kind: input, shape index: {}]
  %s4 = inlined_call_operand.hbm [shape: f32[256,128], index: 4, kind: output, shape index: {}]
  %s5 = sld [smem:[#allocation0]]
  $region101: #{tpu_custom_call.1} parent=0
    _
  %s7 = ssub.s32 1, %s5
  %s8 = scalar_select 0, %s7, %s5
  $region1: #{tpu_custom_call.1} parent=0
    #allocation5 [shape = 'u8[32768]{0}', space=vmem, size = 0x8000, scoped, tag = 'input window, operand 1']
    #allocation6 [shape = 's32[2]{0}', space=sflag, size = 0x8, scoped, tag = 'scoped memory for tpu_custom_call.1']
    #allocation7 [shape = 's32[2]{0}', space=sflag, size = 0x8, scoped, tag = 'scoped memory for tpu_custom_call.1']
    #allocation8 [shape = 'u8[32768]{0}', space=vmem, size = 0x8000, scoped, tag = 'input window, operand 2']
    #allocation9 [shape = 's32[2]{0}', space=sflag, size = 0x8, scoped, tag = 'scoped memory for tpu_custom_call.1']
    #allocation10 [shape = 'u8[131072]{0}', space=vmem, size = 0x20000, scoped, tag = 'input window, operand 3']
    #allocation11 [shape = 'u8[131072]{0}', space=vmem, size = 0x20000, scoped, tag = 'output window, operand 0']
    %9 = vsyncpa [#allocation6], 0
    %s10 = scalar_lea.sflag [#allocation6], 1
    %11 = vsyncpa %s10, 0
    %12 = vsyncpa [#allocation9], 0
    %s13 = scalar_lea.sflag [#allocation9], 1
    %14 = vsyncpa %s13, 0
    %15 = vsyncpa [#allocation7], 0
    %s16 = scalar_lea.sflag [#allocation7], 1
    %17 = vsyncpa %s16, 0
    loop: start=0, step=1, limit=14
    $region2: #{tpu_custom_call.1} parent=1 // loop_pre_header
      _
    $region3: #{tpu_custom_call.1} parent=1 // loop_header
      %s19 = sphi 0, %s23
      %p20 = scmp.ge.s32.totalorder %s19, 14
      %s26 = sphi 0, %s45
      %s27 = sphi 0, %s41
      %s28 = sphi 0, %s37
      %s29 = sphi 0, %s26
      %s30 = sphi 0, %s27
      %s31 = sphi 0, %s28
      %s32 = sphi 0, %s29
      %s33 = sphi 0, %s30
      %s34 = sphi 0, %s31
      %s50 = sphi 0, %s52
      %s53 = sphi 0, %s50
      %s54 = sphi 0, %s53
      %s70 = sphi 0, %s54
      %s84 = sphi 0, %s86
      %s87 = sphi 0, %s84
      %s88 = sphi 0, %s87
      %s104 = sphi 0, %s88
      %s110 = sphi 0, %s112
      %s113 = sphi 0, %s110
      %s114 = sphi 0, %s113
      %s130 = sphi 0, %s114
      %s136 = sphi 0, %s138
      %s139 = sphi 0, %s136
      %s140 = sphi 0, %s139
      %s156 = sphi 0, %s140
    $region4: #{tpu_custom_call.1} parent=1 // loop_header_branch
      %22 = sbr.rel (%p20) target = $region8
    $region5: #{tpu_custom_call.1} parent=1 // loop_body
      %s24 = ssub.s32 %s19, 1
      %s25 = ssub.s32 %s19, 2
      %s35 = sadd.s32 1, %s28
      %p36 = scmp.ge.s32.totalorder %s35, 2
      %s37 = scalar_select %p36, 0, %s35
      %s38 = sadd.s32 1, %s27
      %s39 = scalar_select %p36, %s38, %s27
      %p40 = scmp.ge.s32.totalorder %s39, 2
      %s41 = scalar_select %p40, 0, %s39
      %s42 = sadd.s32 1, %s26
      %s43 = scalar_select %p40, %s42, %s26
      %p44 = scmp.ge.s32.totalorder %s43, 3
      %s45 = scalar_select %p44, 0, %s43
      %s46 = ssub.s32 %s27, %s41
      %s47 = ssub.s32 %s28, %s37
      %s48 = sor.u32 %s46, %s47
      %p49 = scmp.eq.s32.totalorder %s48, 0
      %s51 = sadd.s32 %s50, 1
      %s52 = scalar_select %p49, %s50, %s51
      %p55 = pneg %p49
      %p56 = scmp.eq.s32.totalorder %s19, 11
      %p57 = por %p55, %p56
      %p58 = scmp.ne.s32.totalorder %s50, %s53
      %p59 = scmp.eq.s32.totalorder %s19, 0
      %p60 = por %p58, %p59
      %p61 = scmp.ne.s32.totalorder %s50, %s53
      %p62 = scmp.eq.s32.totalorder %s24, 11
      %p63 = por %p61, %p62
      %p64 = scmp.ne.s32.totalorder %s53, %s54
      %p65 = scmp.eq.s32.totalorder %s24, 0
      %p66 = por %p64, %p65
      %p67 = scmp.ne.s32.totalorder %s53, %s54
      %p68 = scmp.eq.s32.totalorder %s25, 11
      %p69 = por %p67, %p68
      %p71 = scmp.ne.s32.totalorder %s54, %s70
      %p72 = scmp.eq.s32.totalorder %s25, 0
      %p73 = por %p71, %p72
      %p74 = scmp.eq.s32.totalorder %s26, 0
      %s75 = scalar_select %p74, 0, %s27
      %s76 = scalar_select %p74, 0, %s28
      %p77 = scmp.eq.s32.totalorder %s45, 0
      %s78 = scalar_select %p77, 0, %s41
      %s79 = scalar_select %p77, 0, %s37
      %s80 = ssub.s32 %s75, %s78
      %s81 = ssub.s32 %s76, %s79
      %s82 = sor.u32 %s80, %s81
      %p83 = scmp.eq.s32.totalorder %s82, 0
      %s85 = sadd.s32 %s84, 1
      %s86 = scalar_select %p83, %s84, %s85
      %p89 = pneg %p83
      %p90 = scmp.eq.s32.totalorder %s19, 11
      %p91 = por %p89, %p90
      %p92 = scmp.ne.s32.totalorder %s84, %s87
      %p93 = scmp.eq.s32.totalorder %s19, 0
      %p94 = por %p92, %p93
      %p95 = scmp.ne.s32.totalorder %s84, %s87
      %p96 = scmp.eq.s32.totalorder %s24, 11
      %p97 = por %p95, %p96
      %p98 = scmp.ne.s32.totalorder %s87, %s88
      %p99 = scmp.eq.s32.totalorder %s24, 0
      %p100 = por %p98, %p99
      %p101 = scmp.ne.s32.totalorder %s87, %s88
      %p102 = scmp.eq.s32.totalorder %s25, 11
      %p103 = por %p101, %p102
      %p105 = scmp.ne.s32.totalorder %s88, %s104
      %p106 = scmp.eq.s32.totalorder %s25, 0
      %p107 = por %p105, %p106
      %s108 = ssub.s32 %s26, %s45
      %p109 = scmp.eq.s32.totalorder %s108, 0
      %s111 = sadd.s32 %s110, 1
      %s112 = scalar_select %p109, %s110, %s111
      %p115 = pneg %p109
      %p116 = scmp.eq.s32.totalorder %s19, 11
      %p117 = por %p115, %p116
      %p118 = scmp.ne.s32.totalorder %s110, %s113
      %p119 = scmp.eq.s32.totalorder %s19, 0
      %p120 = por %p118, %p119
      %p121 = scmp.ne.s32.totalorder %s110, %s113
      %p122 = scmp.eq.s32.totalorder %s24, 11
      %p123 = por %p121, %p122
      %p124 = scmp.ne.s32.totalorder %s113, %s114
      %p125 = scmp.eq.s32.totalorder %s24, 0
      %p126 = por %p124, %p125
      %p127 = scmp.ne.s32.totalorder %s113, %s114
      %p128 = scmp.eq.s32.totalorder %s25, 11
      %p129 = por %p127, %p128
      %p131 = scmp.ne.s32.totalorder %s114, %s130
      %p132 = scmp.eq.s32.totalorder %s25, 0
      %p133 = por %p131, %p132
      %s134 = ssub.s32 %s27, %s41
      %p135 = scmp.eq.s32.totalorder %s134, 0
      %s137 = sadd.s32 %s136, 1
      %s138 = scalar_select %p135, %s136, %s137
      %p141 = pneg %p135
      %p142 = scmp.eq.s32.totalorder %s19, 11
      %p143 = por %p141, %p142
      %p144 = scmp.ne.s32.totalorder %s136, %s139
      %p145 = scmp.eq.s32.totalorder %s19, 0
      %p146 = por %p144, %p145
      %p147 = scmp.ne.s32.totalorder %s136, %s139
      %p148 = scmp.eq.s32.totalorder %s24, 11
      %p149 = por %p147, %p148
      %p150 = scmp.ne.s32.totalorder %s139, %s140
      %p151 = scmp.eq.s32.totalorder %s24, 0
      %p152 = por %p150, %p151
      %p153 = scmp.ne.s32.totalorder %s139, %s140
      %p154 = scmp.eq.s32.totalorder %s25, 11
      %p155 = por %p153, %p154
      %p157 = scmp.ne.s32.totalorder %s140, %s156
      %p158 = scmp.eq.s32.totalorder %s25, 0
      %p159 = por %p157, %p158
      %p160 = scmp.le.s32.totalorder 1, %s19
      %p161 = scmp.lt.s32.totalorder %s19, 13
      %p162 = pnand %p160, %p161
      %p163 = pneg %p162
      // Predicated region
      $region9: #{tpu_custom_call.1} parent=5 // pred_check
        _
      $region10: #{tpu_custom_call.1} parent=5 // pred_check_branch
        %165 = sbr.rel (%p162) target = $region12
      $region11: #{tpu_custom_call.1} parent=5 // pred_region
        %s166 = ssub.s32 %s19, 1
      $region12: #{tpu_custom_call.1} parent=5 // pred_fallthru
        _
      %p167 = scmp.lt.s32.totalorder %s19, 12
      // Predicated region
      $region13: #{tpu_custom_call.1} parent=5 // pred_check
        %p168 = pneg %p167
      $region14: #{tpu_custom_call.1} parent=5 // pred_check_branch
        %170 = sbr.rel (%p168) target = $region16
      $region15: #{tpu_custom_call.1} parent=5 // pred_region
        // Predicated region
        $region17: #{tpu_custom_call.1} parent=15 // pred_check
          %p171 = pneg %p60
        $region18: #{tpu_custom_call.1} parent=15 // pred_check_branch
          %173 = sbr.rel (%p171) target = $region20
        $region19: #{tpu_custom_call.1} parent=15 // pred_region
          %s174 = sand.u32 %s50, 1
          %s175 = scalar_lea.sflag [#allocation6], %s174
          %s176 = sand.u32 %s50, 1
          %s177 = smul.addr %s176, 32
          %s178 = scalar_lea.vmem [#allocation5], %s177
          %s179 = smul.u32 4, %s27
          %s181 = ssub.s32 512, 512
          %182 = vsyncadd %s175, %s181
          %s183 = smul.addr %s179, 2
          %s184 = sadd.s32 %s28, %s183
          %s185 = smul.addr %s184, 128
          %s186 = scalar_lea.hbm %s1, %s185
          %s187 = sshll.u32 %s178, 4
          %s188 = int_to_ptr.vmem [resolvable:$true] %s187
          %193 = dma.hbm_to_vmem [thread:$0]  %s186, 512, %s188, %s175, 256, 128, 8
        $region20: #{tpu_custom_call.1} parent=15 // pred_fallthru
          _
        // Predicated region
        $region21: #{tpu_custom_call.1} parent=15 // pred_check
          %p194 = pneg %p94
        $region22: #{tpu_custom_call.1} parent=15 // pred_check_branch
          %196 = sbr.rel (%p194) target = $region24
        $region23: #{tpu_custom_call.1} parent=15 // pred_region
          %s197 = sand.u32 %s19, 1
          %s198 = scalar_lea.sflag [#allocation9], %s197
          %s199 = sand.u32 %s84, 1
          %s200 = smul.addr %s199, 32
          %s201 = scalar_lea.vmem [#allocation8], %s200
          %p202 = scmp.eq.s32.totalorder %s26, 0
          %s203 = scalar_select %p202, 0, %s27
          %s204 = scalar_select %p202, 0, %s28
          %s205 = smul.u32 4, %s203
          %s207 = ssub.s32 512, 512
          %208 = vsyncadd %s198, %s207
          %s209 = smul.addr %s205, 2
          %s210 = sadd.s32 %s204, %s209
          %s211 = smul.addr %s210, 128
          %s212 = scalar_lea.hbm %s2, %s211
          %s213 = sshll.u32 %s201, 4
          %s214 = int_to_ptr.vmem [resolvable:$true] %s213
          %219 = dma.hbm_to_vmem [thread:$0]  %s212, 512, %s214, %s198, 256, 128, 8
        $region24: #{tpu_custom_call.1} parent=15 // pred_fallthru
          _
        // Predicated region
        $region25: #{tpu_custom_call.1} parent=15 // pred_check
          %p220 = pneg %p120
        $region26: #{tpu_custom_call.1} parent=15 // pred_check_branch
          %222 = sbr.rel (%p220) target = $region28
        $region27: #{tpu_custom_call.1} parent=15 // pred_region
          %s223 = sand.u32 %s19, 1
          %s224 = scalar_lea.sflag [#allocation9], %s223
          %s225 = sand.u32 %s110, 1
          %s226 = smul.addr %s225, 128
          %s227 = scalar_lea.vmem [#allocation10], %s226
          %s229 = ssub.s32 2048, 2048
          %230 = vsyncadd %s224, %s229
          %s231 = smul.addr %s26, 32
          %s232 = smul.addr %s231, 64
          %s233 = scalar_lea.hbm %s3, %s232
          %s234 = sshll.u32 %s227, 4
          %s235 = int_to_ptr.vmem [resolvable:$true] %s234
          %240 = dma.hbm_to_vmem [thread:$0]  %s233, 2048, %s235, %s224, 64, 64, 4
        $region28: #{tpu_custom_call.1} parent=15 // pred_fallthru
          _
      $region16: #{tpu_custom_call.1} parent=5 // pred_fallthru
        _
      %p241 = scmp.le.s32.totalorder 1, %s19
      %p242 = scmp.lt.s32.totalorder %s19, 13
      %p243 = pnand %p241, %p242
      %p244 = pneg %p243
      // Predicated region
      $region29: #{tpu_custom_call.1} parent=5 // pred_check
        _
      $region30: #{tpu_custom_call.1} parent=5 // pred_check_branch
        %246 = sbr.rel (%p243) target = $region32
      $region31: #{tpu_custom_call.1} parent=5 // pred_region
        %s247 = ssub.s32 %s19, 1
        %s248 = sand.u32 %s53, 1
        %s249 = scalar_lea.sflag [#allocation6], %s248
        %s250 = sand.u32 %s53, 1
        %s251 = smul.addr %s250, 32
        %s252 = scalar_lea.vmem [#allocation5], %s251
        // Predicated region
        $region33: #{tpu_custom_call.1} parent=31 // pred_check
          %p253 = pneg %p66
        $region34: #{tpu_custom_call.1} parent=31 // pred_check_branch
          %255 = sbr.rel (%p253) target = $region36
        $region35: #{tpu_custom_call.1} parent=31 // pred_region
          %256 = dma.done %s249, 512
        $region36: #{tpu_custom_call.1} parent=31 // pred_fallthru
          _
        %s257 = sand.u32 %s24, 1
        %s258 = scalar_lea.sflag [#allocation9], %s257
        %s259 = sand.u32 %s87, 1
        %s260 = smul.addr %s259, 32
        %s261 = scalar_lea.vmem [#allocation8], %s260
        // Predicated region
        $region37: #{tpu_custom_call.1} parent=31 // pred_check
          %p262 = pneg %p100
        $region38: #{tpu_custom_call.1} parent=31 // pred_check_branch
          %264 = sbr.rel (%p262) target = $region40
        $region39: #{tpu_custom_call.1} parent=31 // pred_region
          %265 = dma.done %s258, 512
        $region40: #{tpu_custom_call.1} parent=31 // pred_fallthru
          _
        %s266 = sand.u32 %s24, 1
        %s267 = scalar_lea.sflag [#allocation9], %s266
        %s268 = sand.u32 %s113, 1
        %s269 = smul.addr %s268, 128
        %s270 = scalar_lea.vmem [#allocation10], %s269
        // Predicated region
        $region41: #{tpu_custom_call.1} parent=31 // pred_check
          %p271 = pneg %p126
        $region42: #{tpu_custom_call.1} parent=31 // pred_check_branch
          %273 = sbr.rel (%p271) target = $region44
        $region43: #{tpu_custom_call.1} parent=31 // pred_region
          %274 = dma.done %s267, 2048
        $region44: #{tpu_custom_call.1} parent=31 // pred_fallthru
          _
        %s275 = sand.u32 %s53, 1
        %s276 = scalar_lea.sflag [#allocation6], %s275
        %s277 = sand.u32 %s53, 1
        %s278 = smul.addr %s277, 32
        %s279 = scalar_lea.vmem [#allocation5], %s278
        %p280 = pneg %p66
        %p281 = pneg %p63
        %s282 = sand.u32 %s24, 1
        %s283 = scalar_lea.sflag [#allocation9], %s282
        %s284 = sand.u32 %s87, 1
        %s285 = smul.addr %s284, 32
        %s286 = scalar_lea.vmem [#allocation8], %s285
        %p287 = pneg %p100
        %p288 = pneg %p97
        %s289 = sand.u32 %s24, 1
        %s290 = scalar_lea.sflag [#allocation9], %s289
        %s291 = sand.u32 %s113, 1
        %s292 = smul.addr %s291, 128
        %s293 = scalar_lea.vmem [#allocation10], %s292
        %p294 = pneg %p126
        %p295 = pneg %p123
        %p296 = pneg %p152
        %p297 = pneg %p149
        %s298 = sand.u32 %s139, 1
        %s299 = scalar_lea.sflag [#allocation7], %s298
        %s300 = sand.u32 %s139, 1
        %s301 = smul.addr %s300, 128
        %s302 = scalar_lea.vmem [#allocation11], %s301
        %s303 = smul.u32 4, %s30
        %p304 = scmp.eq.s32.totalorder %s29, 0
        %s305 = scalar_select %p304, 0, %s30
        %s306 = scalar_select %p304, 0, %s31
        %s307 = smul.u32 4, %s305
        %s308 = smul.u32 16, %s30
        %p310 = scmp.eq.s32.totalorder %s29, 0
        %p311 = scmp.eq.s32.totalorder %s30, 0
        %p312 = pnand %p310, %p311
        %p313 = pneg %p312
        %p314 = scmp.eq.s32.totalorder %s31, 0
        %p315 = pnand %p313, %p314
        %p316 = pneg %p315
        // Predicated region
        $region45: #{tpu_custom_call.1} parent=31 // pred_check
          _
        $region46: #{tpu_custom_call.1} parent=31 // pred_check_branch
          %318 = sbr.rel (%p315) target = $region48
        $region47: #{tpu_custom_call.1} parent=31 // pred_region
          $region49: #{tpu_custom_call.1} parent=47
            #allocation12 [shape = 's32[1]{0}', space=sflag, size = 0x4, scoped, tag = 'scoped memory for tpu_custom_call.1']
            // Predicated region
            $region50: #{tpu_custom_call.1} parent=49 // pred_check
              _
            $region51: #{tpu_custom_call.1} parent=49 // pred_check_branch
              %320 = sbr.rel target = $region53
            $region52: #{tpu_custom_call.1} parent=49 // pred_region
              %321 = sst [smem:[#allocation15]] [#allocation14]
              %322 = sst [smem:[#allocation16]] [#allocation13]
            $region53: #{tpu_custom_call.1} parent=49 // pred_fallthru
              _
            %324 = shalt.err (0)
            %s326 = sshll.u32 [#allocation2], 4
            %s327 = int_to_ptr.vmem [resolvable:$true] %s326
            %329 = dma.hbm_to_vmem [thread:$0]  %s0, 4096, %s327, [#allocation12]
            %s330 = smul.u32 256, 1
            %s331 = sshll.u32 %s330, 4
            %332 = dma.done [#allocation12], %s331
          loop: start=0, step=1, limit=2
          $region54: #{tpu_custom_call.1} parent=47 // loop_pre_header
            _
          $region55: #{tpu_custom_call.1} parent=47 // loop_header
            %s334 = sphi 0, %s338
            %p335 = scmp.ge.s32.totalorder %s334, 2
          $region56: #{tpu_custom_call.1} parent=47 // loop_header_branch
            %337 = sbr.rel (%p335) target = $region60
          $region57: #{tpu_custom_call.1} parent=47 // loop_body
            %s339 = smul.u32 %s334, 128
            %s340 = scalar_lea.vmem [#allocation2], %s339
            %v341 = vld [vmem:[%s340] sm:$0xff]
            %v342 = vld [vmem:[%s340 + $0x8] sm:$0xff]
            %v343 = vld [vmem:[%s340 + $0x10] sm:$0xff]
            %v344 = vld [vmem:[%s340 + $0x18] sm:$0xff]
            %v345 = vld [vmem:[%s340 + $0x20] sm:$0xff]
            %v346 = vld [vmem:[%s340 + $0x28] sm:$0xff]
            %v347 = vld [vmem:[%s340 + $0x30] sm:$0xff]
            %v348 = vld [vmem:[%s340 + $0x38] sm:$0xff]
            %v349 = vld [vmem:[%s340 + $0x40] sm:$0xff]
            %v350 = vld [vmem:[%s340 + $0x48] sm:$0xff]
            %v351 = vld [vmem:[%s340 + $0x50] sm:$0xff]
            %v352 = vld [vmem:[%s340 + $0x58] sm:$0xff]
            %v353 = vld [vmem:[%s340 + $0x60] sm:$0xff]
            %v354 = vld [vmem:[%s340 + $0x68] sm:$0xff]
            %v355 = vld [vmem:[%s340 + $0x70] sm:$0xff]
            %v356 = vld [vmem:[%s340 + $0x78] sm:$0xff]
            %v357 = vpack.c.bf16 %v342, %v341
            %v358 = vpack.c.bf16 %v344, %v343
            %v359 = vpack.c.bf16 %v346, %v345
            %v360 = vpack.c.bf16 %v348, %v347
            %v361 = vpack.c.bf16 %v350, %v349
            %v362 = vpack.c.bf16 %v352, %v351
            %v363 = vpack.c.bf16 %v354, %v353
            %v364 = vpack.c.bf16 %v356, %v355
            %s365 = sshra.s32 %s339, 4
            %s366 = sand.u32 %s339, 15
            %s367 = smul.addr %s365, 8
            %s368 = scalar_lea.vmem [#allocation3], %s367
            %369 = vst [vmem:[%s368] sm:$0xff] %v357
            %370 = vst [vmem:[%s368 + $0x8] sm:$0xff] %v358
            %371 = vst [vmem:[%s368 + $0x10] sm:$0xff] %v359
            %372 = vst [vmem:[%s368 + $0x18] sm:$0xff] %v360
            %373 = vst [vmem:[%s368 + $0x20] sm:$0xff] %v361
            %374 = vst [vmem:[%s368 + $0x28] sm:$0xff] %v362
            %375 = vst [vmem:[%s368 + $0x30] sm:$0xff] %v363
            %376 = vst [vmem:[%s368 + $0x38] sm:$0xff] %v364
          $region58: #{tpu_custom_call.1} parent=47 // loop_footer
            %s338 = sadd.s32 1, %s334
          $region59: #{tpu_custom_call.1} parent=47 // loop_footer_branch
            %333 = sbr.rel target = $region55
          $region60: #{tpu_custom_call.1} parent=47 // loop_exit
            _
        $region48: #{tpu_custom_call.1} parent=31 // pred_fallthru
          _
        %p377 = scmp.lt.s32.totalorder %s29, 0
        %s378 = ssub.s32 0, %s29
        %s379 = scalar_select %p377, %s378, %s29
        %s380 = sand.u32 %s379, 1
        %s381 = ssub.s32 0, %s380
        %s382 = scalar_select %p377, %s381, %s380
        %s383 = sadd.s32 %s29, 1
        %p384 = scmp.lt.s32.totalorder %s383, 0
        %s385 = ssub.s32 0, %s383
        %s386 = scalar_select %p384, %s385, %s383
        %s387 = sand.u32 %s386, 1
        %s388 = ssub.s32 0, %s387
        %s389 = scalar_select %p384, %s388, %s387
        %p390 = scmp.lt.s32.totalorder %s29, 0
        %s391 = ssub.s32 0, %s29
        %s392 = scalar_select %p390, %s391, %s29
        %s393 = sdiv.u32.pop %s392, 3
        %s394 = srem.u32.pop %s392, 3
        %s395 = ssub.s32 0, %s394
        %s396 = scalar_select %p390, %s395, %s394
        %p397 = scmp.lt.s32.totalorder %s383, 0
        %s398 = ssub.s32 0, %s383
        %s399 = scalar_select %p397, %s398, %s383
        %s400 = sdiv.u32.pop %s399, 3
        %s401 = srem.u32.pop %s399, 3
        %s402 = ssub.s32 0, %s401
        %s403 = scalar_select %p397, %s402, %s401
        %s404 = sadd.s32 %s29, 2
        %p405 = scmp.lt.s32.totalorder %s404, 0
        %s406 = ssub.s32 0, %s404
        %s407 = scalar_select %p405, %s406, %s404
        %s408 = sdiv.u32.pop %s407, 3
        %s409 = srem.u32.pop %s407, 3
        %s410 = ssub.s32 0, %s409
        %s411 = scalar_select %p405, %s410, %s409
        %s412 = smul.u32 %s396, 256
        %s413 = smul.u32 %s31, 128
        %s414 = sadd.s32 %s412, %s413
        %v415 = vld [vmem:[%s252] sm:$0xff]
        %v416 = vld [vmem:[%s252 + $0x8] sm:$0xff]
        %v417 = vld [vmem:[%s252 + $0x10] sm:$0xff]
        %v418 = vld [vmem:[%s252 + $0x18] sm:$0xff]
        %v419 = vunpack.c.l.s8.bf16 %v415
        %v420 = vunpack.c.h.s8.bf16 %v415
        %v421 = vunpack.c.l.s8.bf16 %v416
        %v422 = vunpack.c.h.s8.bf16 %v416
        %v423 = vunpack.c.l.s8.bf16 %v417
        %v424 = vunpack.c.h.s8.bf16 %v417
        %v425 = vunpack.c.l.s8.bf16 %v418
        %v426 = vunpack.c.h.s8.bf16 %v418
        %s427 = sshra.s32 %s414, 4
        %s428 = sand.u32 %s414, 15
        %s429 = smul.addr %s427, 8
        %s430 = scalar_lea.vmem [#allocation3], %s429
        %v431 = vld [vmem:[%s430] sm:$0xff]
        %v432 = vld [vmem:[%s430 + $0x8] sm:$0xff]
        %v433 = vld [vmem:[%s430 + $0x10] sm:$0xff]
        %v434 = vld [vmem:[%s430 + $0x18] sm:$0xff]
        %v435 = vld [vmem:[%s430 + $0x20] sm:$0xff]
        %v436 = vld [vmem:[%s430 + $0x28] sm:$0xff]
        %v437 = vld [vmem:[%s430 + $0x30] sm:$0xff]
        %v438 = vld [vmem:[%s430 + $0x38] sm:$0xff]
        %439 = vmatprep.subr.bf16.mxu0 0
        %440 = vmatpush1.bf16.msra.mxu0 %v431
        %441 = vmatprep.subr.bf16.mxu0 0
        %442 = vmatpush1.bf16.msra.mxu0 %v432
        %443 = vmatprep.subr.bf16.mxu0 0
        %444 = vmatpush1.bf16.msra.mxu0 %v433
        %445 = vmatprep.subr.bf16.mxu0 0
        %446 = vmatpush1.bf16.msra.mxu0 %v434
        %447 = vmatprep.subr.bf16.mxu0 0
        %448 = vmatpush1.bf16.msra.mxu0 %v435
        %449 = vmatprep.subr.bf16.mxu0 0
        %450 = vmatpush1.bf16.msra.mxu0 %v436
        %451 = vmatprep.subr.bf16.mxu0 0
        %452 = vmatpush1.bf16.msra.mxu0 %v437
        %453 = vmatprep.subr.bf16.mxu0 0
        %454 = vmatpush1.bf16.msra.mxu0 %v438
        %455 = vmatprep.subr.bf16.mxu0 0
        %456 = vmatpush1.bf16.msra.mxu0 0
        %457 = vmatprep.subr.bf16.mxu0 0
        %458 = vmatpush1.bf16.msra.mxu0 0
        %459 = vmatprep.subr.bf16.mxu0 0
        %460 = vmatpush1.bf16.msra.mxu0 0
        %461 = vmatprep.subr.bf16.mxu0 0
        %462 = vmatpush1.bf16.msra.mxu0 0
        %463 = vmatprep.subr.bf16.mxu0 0
        %464 = vmatpush1.bf16.msra.mxu0 0
        %465 = vmatprep.subr.bf16.mxu0 0
        %466 = vmatpush1.bf16.msra.mxu0 0
        %467 = vmatprep.subr.bf16.mxu0 0
        %468 = vmatpush1.bf16.msra.mxu0 0
        %469 = vmatprep.subr.bf16.mxu0 0
        %470 = vmatpush1.bf16.msra.mxu0 0
        %471 = vmatprep.mubr.bf16.mxu0 0
        %472 = vmatmul.mubr.bf16.gmra.mrb[0].mxu0 %v419
        %v473 = vpop.f32.mrb[0].mxu0
        %v474 = vadd.f32 0.0, %v473
        %v475 = vpop.f32.mrb[0].mxu0
        %v476 = vpop.f32.mrb[0].mxu0
        %v477 = vadd.f32 0.0, %v476
        %v478 = vpop.f32.mrb[0].mxu0
        %479 = vmatprep.mubr.bf16.mxu0 0
        %480 = vmatmul.mubr.bf16.gmra.mrb[0].mxu0 %v420
        %v481 = vpop.f32.mrb[0].mxu0
        %v482 = vadd.f32 0.0, %v481
        %v483 = vpop.f32.mrb[0].mxu0
        %v484 = vpop.f32.mrb[0].mxu0
        %v485 = vadd.f32 0.0, %v484
        %v486 = vpop.f32.mrb[0].mxu0
        %487 = vmatprep.mubr.bf16.mxu0 0
        %488 = vmatmul.mubr.bf16.gmra.mrb[0].mxu0 %v421
        %v489 = vpop.f32.mrb[0].mxu0
        %v490 = vadd.f32 0.0, %v489
        %v491 = vpop.f32.mrb[0].mxu0
        %v492 = vpop.f32.mrb[0].mxu0
        %v493 = vadd.f32 0.0, %v492
        %v494 = vpop.f32.mrb[0].mxu0
        %495 = vmatprep.mubr.bf16.mxu0 0
        %496 = vmatmul.mubr.bf16.gmra.mrb[0].mxu0 %v422
        %v497 = vpop.f32.mrb[0].mxu0
        %v498 = vadd.f32 0.0, %v497
        %v499 = vpop.f32.mrb[0].mxu0
        %v500 = vpop.f32.mrb[0].mxu0
        %v501 = vadd.f32 0.0, %v500
        %v502 = vpop.f32.mrb[0].mxu0
        %503 = vmatprep.mubr.bf16.mxu0 0
        %504 = vmatmul.mubr.bf16.gmra.mrb[0].mxu0 %v423
        %v505 = vpop.f32.mrb[0].mxu0
        %v506 = vadd.f32 0.0, %v505
        %v507 = vpop.f32.mrb[0].mxu0
        %v508 = vpop.f32.mrb[0].mxu0
        %v509 = vadd.f32 0.0, %v508
        %v510 = vpop.f32.mrb[0].mxu0
        %511 = vmatprep.mubr.bf16.mxu0 0
        %512 = vmatmul.mubr.bf16.gmra.mrb[0].mxu0 %v424
        %v513 = vpop.f32.mrb[0].mxu0
        %v514 = vadd.f32 0.0, %v513
        %v515 = vpop.f32.mrb[0].mxu0
        %v516 = vpop.f32.mrb[0].mxu0
        %v517 = vadd.f32 0.0, %v516
        %v518 = vpop.f32.mrb[0].mxu0
        %519 = vmatprep.mubr.bf16.mxu0 0
        %520 = vmatmul.mubr.bf16.gmra.mrb[0].mxu0 %v425
        %v521 = vpop.f32.mrb[0].mxu0
        %v522 = vadd.f32 0.0, %v521
        %v523 = vpop.f32.mrb[0].mxu0
        %v524 = vpop.f32.mrb[0].mxu0
        %v525 = vadd.f32 0.0, %v524
        %v526 = vpop.f32.mrb[0].mxu0
        %527 = vmatprep.mubr.bf16.mxu0 0
        %528 = vmatmul.mubr.bf16.gmra.mrb[0].mxu0 %v426
        %v529 = vpop.f32.mrb[0].mxu0
        %v530 = vadd.f32 0.0, %v529
        %v531 = vpop.f32.mrb[0].mxu0
        %v532 = vpop.f32.mrb[0].mxu0
        %v533 = vadd.f32 0.0, %v532
        %v534 = vpop.f32.mrb[0].mxu0
        %535 = vdwg.mxu0
        // Predicated region
        $region61: #{tpu_custom_call.1} parent=31 // pred_check
          %p536 = pneg %p314
        $region62: #{tpu_custom_call.1} parent=31 // pred_check_branch
          %538 = sbr.rel (%p536) target = $region64
        $region63: #{tpu_custom_call.1} parent=31 // pred_region
          %539 = vst [vmem:[#allocation4] sm:$0xff] %v474
          %540 = vst [vmem:[#allocation4 + $0x10] sm:$0xff] %v477
          %541 = vst [vmem:[#allocation4 + $0x20] sm:$0xff] %v482
          %542 = vst [vmem:[#allocation4 + $0x30] sm:$0xff] %v485
          %543 = vst [vmem:[#allocation4 + $0x40] sm:$0xff] %v490
          %544 = vst [vmem:[#allocation4 + $0x50] sm:$0xff] %v493
          %545 = vst [vmem:[#allocation4 + $0x60] sm:$0xff] %v498
          %546 = vst [vmem:[#allocation4 + $0x70] sm:$0xff] %v501
          %547 = vst [vmem:[#allocation4 + $0x80] sm:$0xff] %v506
          %548 = vst [vmem:[#allocation4 + $0x90] sm:$0xff] %v509
          %549 = vst [vmem:[#allocation4 + $0xa0] sm:$0xff] %v514
          %550 = vst [vmem:[#allocation4 + $0xb0] sm:$0xff] %v517
          %551 = vst [vmem:[#allocation4 + $0xc0] sm:$0xff] %v522
          %552 = vst [vmem:[#allocation4 + $0xd0] sm:$0xff] %v525
          %553 = vst [vmem:[#allocation4 + $0xe0] sm:$0xff] %v530
          %554 = vst [vmem:[#allocation4 + $0xf0] sm:$0xff] %v533
        $region64: #{tpu_custom_call.1} parent=31 // pred_fallthru
          _
        %p555 = scmp.gt.s32.totalorder %s31, 0
        // Predicated region
        $region65: #{tpu_custom_call.1} parent=31 // pred_check
          %p556 = pneg %p555
        $region66: #{tpu_custom_call.1} parent=31 // pred_check_branch
          %558 = sbr.rel (%p556) target = $region68
        $region67: #{tpu_custom_call.1} parent=31 // pred_region
          %v559 = vld [vmem:[#allocation4] sm:$0xff]
          %v560 = vld [vmem:[#allocation4 + $0x10] sm:$0xff]
          %v561 = vld [vmem:[#allocation4 + $0x20] sm:$0xff]
          %v562 = vld [vmem:[#allocation4 + $0x30] sm:$0xff]
          %v563 = vld [vmem:[#allocation4 + $0x40] sm:$0xff]
          %v564 = vld [vmem:[#allocation4 + $0x50] sm:$0xff]
          %v565 = vld [vmem:[#allocation4 + $0x60] sm:$0xff]
          %v566 = vld [vmem:[#allocation4 + $0x70] sm:$0xff]
          %v567 = vld [vmem:[#allocation4 + $0x80] sm:$0xff]
          %v568 = vld [vmem:[#allocation4 + $0x90] sm:$0xff]
          %v569 = vld [vmem:[#allocation4 + $0xa0] sm:$0xff]
          %v570 = vld [vmem:[#allocation4 + $0xb0] sm:$0xff]
          %v571 = vld [vmem:[#allocation4 + $0xc0] sm:$0xff]
          %v572 = vld [vmem:[#allocation4 + $0xd0] sm:$0xff]
          %v573 = vld [vmem:[#allocation4 + $0xe0] sm:$0xff]
          %v574 = vld [vmem:[#allocation4 + $0xf0] sm:$0xff]
          %v575 = vadd.f32 %v559, %v474
          %v576 = vadd.f32 %v560, %v477
          %v577 = vadd.f32 %v561, %v482
          %v578 = vadd.f32 %v562, %v485
          %v579 = vadd.f32 %v563, %v490
          %v580 = vadd.f32 %v564, %v493
          %v581 = vadd.f32 %v565, %v498
          %v582 = vadd.f32 %v566, %v501
          %v583 = vadd.f32 %v567, %v506
          %v584 = vadd.f32 %v568, %v509
          %v585 = vadd.f32 %v569, %v514
          %v586 = vadd.f32 %v570, %v517
          %v587 = vadd.f32 %v571, %v522
          %v588 = vadd.f32 %v572, %v525
          %v589 = vadd.f32 %v573, %v530
          %v590 = vadd.f32 %v574, %v533
          %591 = vst [vmem:[#allocation4] sm:$0xff] %v575
          %592 = vst [vmem:[#allocation4 + $0x10] sm:$0xff] %v576
          %593 = vst [vmem:[#allocation4 + $0x20] sm:$0xff] %v577
          %594 = vst [vmem:[#allocation4 + $0x30] sm:$0xff] %v578
          %595 = vst [vmem:[#allocation4 + $0x40] sm:$0xff] %v579
          %596 = vst [vmem:[#allocation4 + $0x50] sm:$0xff] %v580
          %597 = vst [vmem:[#allocation4 + $0x60] sm:$0xff] %v581
          %598 = vst [vmem:[#allocation4 + $0x70] sm:$0xff] %v582
          %599 = vst [vmem:[#allocation4 + $0x80] sm:$0xff] %v583
          %600 = vst [vmem:[#allocation4 + $0x90] sm:$0xff] %v584
          %601 = vst [vmem:[#allocation4 + $0xa0] sm:$0xff] %v585
          %602 = vst [vmem:[#allocation4 + $0xb0] sm:$0xff] %v586
          %603 = vst [vmem:[#allocation4 + $0xc0] sm:$0xff] %v587
          %604 = vst [vmem:[#allocation4 + $0xd0] sm:$0xff] %v588
          %605 = vst [vmem:[#allocation4 + $0xe0] sm:$0xff] %v589
          %606 = vst [vmem:[#allocation4 + $0xf0] sm:$0xff] %v590
        $region68: #{tpu_custom_call.1} parent=31 // pred_fallthru
          _
        %p607 = pnand %p310, %p314
        %p608 = pneg %p607
        // Predicated region
        $region69: #{tpu_custom_call.1} parent=31 // pred_check
          _
        $region70: #{tpu_custom_call.1} parent=31 // pred_check_branch
          %610 = sbr.rel (%p607) target = $region72
        $region71: #{tpu_custom_call.1} parent=31 // pred_region
          %611 = vst [vmem:[#allocation4 + $0x8] sm:$0xff] 0.0
          %612 = vst [vmem:[#allocation4 + $0x18] sm:$0xff] 0.0
          %613 = vst [vmem:[#allocation4 + $0x28] sm:$0xff] 0.0
          %614 = vst [vmem:[#allocation4 + $0x38] sm:$0xff] 0.0
          %615 = vst [vmem:[#allocation4 + $0x48] sm:$0xff] 0.0
          %616 = vst [vmem:[#allocation4 + $0x58] sm:$0xff] 0.0
          %617 = vst [vmem:[#allocation4 + $0x68] sm:$0xff] 0.0
          %618 = vst [vmem:[#allocation4 + $0x78] sm:$0xff] 0.0
          %619 = vst [vmem:[#allocation4 + $0x88] sm:$0xff] 0.0
          %620 = vst [vmem:[#allocation4 + $0x98] sm:$0xff] 0.0
          %621 = vst [vmem:[#allocation4 + $0xa8] sm:$0xff] 0.0
          %622 = vst [vmem:[#allocation4 + $0xb8] sm:$0xff] 0.0
          %623 = vst [vmem:[#allocation4 + $0xc8] sm:$0xff] 0.0
          %624 = vst [vmem:[#allocation4 + $0xd8] sm:$0xff] 0.0
          %625 = vst [vmem:[#allocation4 + $0xe8] sm:$0xff] 0.0
          %626 = vst [vmem:[#allocation4 + $0xf8] sm:$0xff] 0.0
        $region72: #{tpu_custom_call.1} parent=31 // pred_fallthru
          _
        %p627 = scmp.gt.s32.totalorder %s29, 0
        // Predicated region
        $region73: #{tpu_custom_call.1} parent=31 // pred_check
          %p628 = pneg %p627
        $region74: #{tpu_custom_call.1} parent=31 // pred_check_branch
          %630 = sbr.rel (%p628) target = $region76
        $region75: #{tpu_custom_call.1} parent=31 // pred_region
          %s631 = smul.u32 %s411, 256
          %s632 = sadd.s32 %s631, %s413
          %v633 = vld [vmem:[%s261] sm:$0xff]
          %v634 = vld [vmem:[%s261 + $0x8] sm:$0xff]
          %v635 = vld [vmem:[%s261 + $0x10] sm:$0xff]
          %v636 = vld [vmem:[%s261 + $0x18] sm:$0xff]
          %v637 = vunpack.c.l.s8.bf16 %v633
          %v638 = vunpack.c.h.s8.bf16 %v633
          %v639 = vunpack.c.l.s8.bf16 %v634
          %v640 = vunpack.c.h.s8.bf16 %v634
          %v641 = vunpack.c.l.s8.bf16 %v635
          %v642 = vunpack.c.h.s8.bf16 %v635
          %v643 = vunpack.c.l.s8.bf16 %v636
          %v644 = vunpack.c.h.s8.bf16 %v636
          %s645 = sshra.s32 %s632, 4
          %s646 = sand.u32 %s632, 15
          %s647 = smul.addr %s645, 8
          %s648 = scalar_lea.vmem [#allocation3], %s647
          %v649 = vld [vmem:[%s648] sm:$0xff]
          %v650 = vld [vmem:[%s648 + $0x8] sm:$0xff]
          %v651 = vld [vmem:[%s648 + $0x10] sm:$0xff]
          %v652 = vld [vmem:[%s648 + $0x18] sm:$0xff]
          %v653 = vld [vmem:[%s648 + $0x20] sm:$0xff]
          %v654 = vld [vmem:[%s648 + $0x28] sm:$0xff]
          %v655 = vld [vmem:[%s648 + $0x30] sm:$0xff]
          %v656 = vld [vmem:[%s648 + $0x38] sm:$0xff]
          %657 = vmatprep.subr.bf16.mxu0 0
          %658 = vmatpush1.bf16.msra.mxu0 %v649
          %659 = vmatprep.subr.bf16.mxu0 0
          %660 = vmatpush1.bf16.msra.mxu0 %v650
          %661 = vmatprep.subr.bf16.mxu0 0
          %662 = vmatpush1.bf16.msra.mxu0 %v651
          %663 = vmatprep.subr.bf16.mxu0 0
          %664 = vmatpush1.bf16.msra.mxu0 %v652
          %665 = vmatprep.subr.bf16.mxu0 0
          %666 = vmatpush1.bf16.msra.mxu0 %v653
          %667 = vmatprep.subr.bf16.mxu0 0
          %668 = vmatpush1.bf16.msra.mxu0 %v654
          %669 = vmatprep.subr.bf16.mxu0 0
          %670 = vmatpush1.bf16.msra.mxu0 %v655
          %671 = vmatprep.subr.bf16.mxu0 0
          %672 = vmatpush1.bf16.msra.mxu0 %v656
          %673 = vmatprep.subr.bf16.mxu0 0
          %674 = vmatpush1.bf16.msra.mxu0 0
          %675 = vmatprep.subr.bf16.mxu0 0
          %676 = vmatpush1.bf16.msra.mxu0 0
          %677 = vmatprep.subr.bf16.mxu0 0
          %678 = vmatpush1.bf16.msra.mxu0 0
          %679 = vmatprep.subr.bf16.mxu0 0
          %680 = vmatpush1.bf16.msra.mxu0 0
          %681 = vmatprep.subr.bf16.mxu0 0
          %682 = vmatpush1.bf16.msra.mxu0 0
          %683 = vmatprep.subr.bf16.mxu0 0
          %684 = vmatpush1.bf16.msra.mxu0 0
          %685 = vmatprep.subr.bf16.mxu0 0
          %686 = vmatpush1.bf16.msra.mxu0 0
          %687 = vmatprep.subr.bf16.mxu0 0
          %688 = vmatpush1.bf16.msra.mxu0 0
          %689 = vmatprep.mubr.bf16.mxu0 0
          %690 = vmatmul.mubr.bf16.gmra.mrb[0].mxu0 %v637
          %v691 = vpop.f32.mrb[0].mxu0
          %v692 = vadd.f32 0.0, %v691
          %v693 = vpop.f32.mrb[0].mxu0
          %v694 = vpop.f32.mrb[0].mxu0
          %v695 = vadd.f32 0.0, %v694
          %v696 = vpop.f32.mrb[0].mxu0
          %697 = vmatprep.mubr.bf16.mxu0 0
          %698 = vmatmul.mubr.bf16.gmra.mrb[0].mxu0 %v638
          %v699 = vpop.f32.mrb[0].mxu0
          %v700 = vadd.f32 0.0, %v699
          %v701 = vpop.f32.mrb[0].mxu0
          %v702 = vpop.f32.mrb[0].mxu0
          %v703 = vadd.f32 0.0, %v702
          %v704 = vpop.f32.mrb[0].mxu0
          %705 = vmatprep.mubr.bf16.mxu0 0
          %706 = vmatmul.mubr.bf16.gmra.mrb[0].mxu0 %v639
          %v707 = vpop.f32.mrb[0].mxu0
          %v708 = vadd.f32 0.0, %v707
          %v709 = vpop.f32.mrb[0].mxu0
          %v710 = vpop.f32.mrb[0].mxu0
          %v711 = vadd.f32 0.0, %v710
          %v712 = vpop.f32.mrb[0].mxu0
          %713 = vmatprep.mubr.bf16.mxu0 0
          %714 = vmatmul.mubr.bf16.gmra.mrb[0].mxu0 %v640
          %v715 = vpop.f32.mrb[0].mxu0
          %v716 = vadd.f32 0.0, %v715
          %v717 = vpop.f32.mrb[0].mxu0
          %v718 = vpop.f32.mrb[0].mxu0
          %v719 = vadd.f32 0.0, %v718
          %v720 = vpop.f32.mrb[0].mxu0
          %721 = vmatprep.mubr.bf16.mxu0 0
          %722 = vmatmul.mubr.bf16.gmra.mrb[0].mxu0 %v641
          %v723 = vpop.f32.mrb[0].mxu0
          %v724 = vadd.f32 0.0, %v723
          %v725 = vpop.f32.mrb[0].mxu0
          %v726 = vpop.f32.mrb[0].mxu0
          %v727 = vadd.f32 0.0, %v726
          %v728 = vpop.f32.mrb[0].mxu0
          %729 = vmatprep.mubr.bf16.mxu0 0
          %730 = vmatmul.mubr.bf16.gmra.mrb[0].mxu0 %v642
          %v731 = vpop.f32.mrb[0].mxu0
          %v732 = vadd.f32 0.0, %v731
          %v733 = vpop.f32.mrb[0].mxu0
          %v734 = vpop.f32.mrb[0].mxu0
          %v735 = vadd.f32 0.0, %v734
          %v736 = vpop.f32.mrb[0].mxu0
          %737 = vmatprep.mubr.bf16.mxu0 0
          %738 = vmatmul.mubr.bf16.gmra.mrb[0].mxu0 %v643
          %v739 = vpop.f32.mrb[0].mxu0
          %v740 = vadd.f32 0.0, %v739
          %v741 = vpop.f32.mrb[0].mxu0
          %v742 = vpop.f32.mrb[0].mxu0
          %v743 = vadd.f32 0.0, %v742
          %v744 = vpop.f32.mrb[0].mxu0
          %745 = vmatprep.mubr.bf16.mxu0 0
          %746 = vmatmul.mubr.bf16.gmra.mrb[0].mxu0 %v644
          %v747 = vpop.f32.mrb[0].mxu0
          %v748 = vadd.f32 0.0, %v747
          %v749 = vpop.f32.mrb[0].mxu0
          %v750 = vpop.f32.mrb[0].mxu0
          %v751 = vadd.f32 0.0, %v750
          %v752 = vpop.f32.mrb[0].mxu0
          %753 = vdwg.mxu0
          // Predicated region
          $region77: #{tpu_custom_call.1} parent=75 // pred_check
            %p754 = pneg %p314
          $region78: #{tpu_custom_call.1} parent=75 // pred_check_branch
            %756 = sbr.rel (%p754) target = $region80
          $region79: #{tpu_custom_call.1} parent=75 // pred_region
            %757 = vst [vmem:[#allocation4 + $0x8] sm:$0xff] %v692
            %758 = vst [vmem:[#allocation4 + $0x18] sm:$0xff] %v695
            %759 = vst [vmem:[#allocation4 + $0x28] sm:$0xff] %v700
            %760 = vst [vmem:[#allocation4 + $0x38] sm:$0xff] %v703
            %761 = vst [vmem:[#allocation4 + $0x48] sm:$0xff] %v708
            %762 = vst [vmem:[#allocation4 + $0x58] sm:$0xff] %v711
            %763 = vst [vmem:[#allocation4 + $0x68] sm:$0xff] %v716
            %764 = vst [vmem:[#allocation4 + $0x78] sm:$0xff] %v719
            %765 = vst [vmem:[#allocation4 + $0x88] sm:$0xff] %v724
            %766 = vst [vmem:[#allocation4 + $0x98] sm:$0xff] %v727
            %767 = vst [vmem:[#allocation4 + $0xa8] sm:$0xff] %v732
            %768 = vst [vmem:[#allocation4 + $0xb8] sm:$0xff] %v735
            %769 = vst [vmem:[#allocation4 + $0xc8] sm:$0xff] %v740
            %770 = vst [vmem:[#allocation4 + $0xd8] sm:$0xff] %v743
            %771 = vst [vmem:[#allocation4 + $0xe8] sm:$0xff] %v748
            %772 = vst [vmem:[#allocation4 + $0xf8] sm:$0xff] %v751
          $region80: #{tpu_custom_call.1} parent=75 // pred_fallthru
            _
          // Predicated region
          $region81: #{tpu_custom_call.1} parent=75 // pred_check
            %p773 = pneg %p555
          $region82: #{tpu_custom_call.1} parent=75 // pred_check_branch
            %775 = sbr.rel (%p773) target = $region84
          $region83: #{tpu_custom_call.1} parent=75 // pred_region
            %v776 = vld [vmem:[#allocation4 + $0x8] sm:$0xff]
            %v777 = vld [vmem:[#allocation4 + $0x18] sm:$0xff]
            %v778 = vld [vmem:[#allocation4 + $0x28] sm:$0xff]
            %v779 = vld [vmem:[#allocation4 + $0x38] sm:$0xff]
            %v780 = vld [vmem:[#allocation4 + $0x48] sm:$0xff]
            %v781 = vld [vmem:[#allocation4 + $0x58] sm:$0xff]
            %v782 = vld [vmem:[#allocation4 + $0x68] sm:$0xff]
            %v783 = vld [vmem:[#allocation4 + $0x78] sm:$0xff]
            %v784 = vld [vmem:[#allocation4 + $0x88] sm:$0xff]
            %v785 = vld [vmem:[#allocation4 + $0x98] sm:$0xff]
            %v786 = vld [vmem:[#allocation4 + $0xa8] sm:$0xff]
            %v787 = vld [vmem:[#allocation4 + $0xb8] sm:$0xff]
            %v788 = vld [vmem:[#allocation4 + $0xc8] sm:$0xff]
            %v789 = vld [vmem:[#allocation4 + $0xd8] sm:$0xff]
            %v790 = vld [vmem:[#allocation4 + $0xe8] sm:$0xff]
            %v791 = vld [vmem:[#allocation4 + $0xf8] sm:$0xff]
            %v792 = vadd.f32 %v776, %v692
            %v793 = vadd.f32 %v777, %v695
            %v794 = vadd.f32 %v778, %v700
            %v795 = vadd.f32 %v779, %v703
            %v796 = vadd.f32 %v780, %v708
            %v797 = vadd.f32 %v781, %v711
            %v798 = vadd.f32 %v782, %v716
            %v799 = vadd.f32 %v783, %v719
            %v800 = vadd.f32 %v784, %v724
            %v801 = vadd.f32 %v785, %v727
            %v802 = vadd.f32 %v786, %v732
            %v803 = vadd.f32 %v787, %v735
            %v804 = vadd.f32 %v788, %v740
            %v805 = vadd.f32 %v789, %v743
            %v806 = vadd.f32 %v790, %v748
            %v807 = vadd.f32 %v791, %v751
            %808 = vst [vmem:[#allocation4 + $0x8] sm:$0xff] %v792
            %809 = vst [vmem:[#allocation4 + $0x18] sm:$0xff] %v793
            %810 = vst [vmem:[#allocation4 + $0x28] sm:$0xff] %v794
            %811 = vst [vmem:[#allocation4 + $0x38] sm:$0xff] %v795
            %812 = vst [vmem:[#allocation4 + $0x48] sm:$0xff] %v796
            %813 = vst [vmem:[#allocation4 + $0x58] sm:$0xff] %v797
            %814 = vst [vmem:[#allocation4 + $0x68] sm:$0xff] %v798
            %815 = vst [vmem:[#allocation4 + $0x78] sm:$0xff] %v799
            %816 = vst [vmem:[#allocation4 + $0x88] sm:$0xff] %v800
            %817 = vst [vmem:[#allocation4 + $0x98] sm:$0xff] %v801
            %818 = vst [vmem:[#allocation4 + $0xa8] sm:$0xff] %v802
            %819 = vst [vmem:[#allocation4 + $0xb8] sm:$0xff] %v803
            %820 = vst [vmem:[#allocation4 + $0xc8] sm:$0xff] %v804
            %821 = vst [vmem:[#allocation4 + $0xd8] sm:$0xff] %v805
            %822 = vst [vmem:[#allocation4 + $0xe8] sm:$0xff] %v806
            %823 = vst [vmem:[#allocation4 + $0xf8] sm:$0xff] %v807
          $region84: #{tpu_custom_call.1} parent=75 // pred_fallthru
            _
        $region76: #{tpu_custom_call.1} parent=31 // pred_fallthru
          _
        %p824 = scmp.eq.s32.totalorder %s31, 1
        // Predicated region
        $region85: #{tpu_custom_call.1} parent=31 // pred_check
          %p825 = pneg %p824
        $region86: #{tpu_custom_call.1} parent=31 // pred_check_branch
          %827 = sbr.rel (%p825) target = $region88
        $region87: #{tpu_custom_call.1} parent=31 // pred_region
          %v828 = vld [vmem:[#allocation4] sm:$0xff]
          %v829 = vld [vmem:[#allocation4 + $0x8] sm:$0xff]
          %v830 = vld [vmem:[#allocation4 + $0x10] sm:$0xff]
          %v831 = vld [vmem:[#allocation4 + $0x18] sm:$0xff]
          %v832 = vld [vmem:[#allocation4 + $0x20] sm:$0xff]
          %v833 = vld [vmem:[#allocation4 + $0x28] sm:$0xff]
          %v834 = vld [vmem:[#allocation4 + $0x30] sm:$0xff]
          %v835 = vld [vmem:[#allocation4 + $0x38] sm:$0xff]
          %v836 = vld [vmem:[#allocation4 + $0x40] sm:$0xff]
          %v837 = vld [vmem:[#allocation4 + $0x48] sm:$0xff]
          %v838 = vld [vmem:[#allocation4 + $0x50] sm:$0xff]
          %v839 = vld [vmem:[#allocation4 + $0x58] sm:$0xff]
          %v840 = vld [vmem:[#allocation4 + $0x60] sm:$0xff]
          %v841 = vld [vmem:[#allocation4 + $0x68] sm:$0xff]
          %v842 = vld [vmem:[#allocation4 + $0x70] sm:$0xff]
          %v843 = vld [vmem:[#allocation4 + $0x78] sm:$0xff]
          %v844 = vld [vmem:[#allocation4 + $0x80] sm:$0xff]
          %v845 = vld [vmem:[#allocation4 + $0x88] sm:$0xff]
          %v846 = vld [vmem:[#allocation4 + $0x90] sm:$0xff]
          %v847 = vld [vmem:[#allocation4 + $0x98] sm:$0xff]
          %v848 = vld [vmem:[#allocation4 + $0xa0] sm:$0xff]
          %v849 = vld [vmem:[#allocation4 + $0xa8] sm:$0xff]
          %v850 = vld [vmem:[#allocation4 + $0xb0] sm:$0xff]
          %v851 = vld [vmem:[#allocation4 + $0xb8] sm:$0xff]
          %v852 = vld [vmem:[#allocation4 + $0xc0] sm:$0xff]
          %v853 = vld [vmem:[#allocation4 + $0xc8] sm:$0xff]
          %v854 = vld [vmem:[#allocation4 + $0xd0] sm:$0xff]
          %v855 = vld [vmem:[#allocation4 + $0xd8] sm:$0xff]
          %v856 = vld [vmem:[#allocation4 + $0xe0] sm:$0xff]
          %v857 = vld [vmem:[#allocation4 + $0xe8] sm:$0xff]
          %v858 = vld [vmem:[#allocation4 + $0xf0] sm:$0xff]
          %v859 = vld [vmem:[#allocation4 + $0xf8] sm:$0xff]
          %v860 = vpack.c.bf16 %v830, %v828
          %v861 = vpack.c.bf16 %v831, %v829
          %v862 = vpack.c.bf16 %v834, %v832
          %v863 = vpack.c.bf16 %v835, %v833
          %v864 = vpack.c.bf16 %v838, %v836
          %v865 = vpack.c.bf16 %v839, %v837
          %v866 = vpack.c.bf16 %v842, %v840
          %v867 = vpack.c.bf16 %v843, %v841
          %v868 = vpack.c.bf16 %v846, %v844
          %v869 = vpack.c.bf16 %v847, %v845
          %v870 = vpack.c.bf16 %v850, %v848
          %v871 = vpack.c.bf16 %v851, %v849
          %v872 = vpack.c.bf16 %v854, %v852
          %v873 = vpack.c.bf16 %v855, %v853
          %v874 = vpack.c.bf16 %v858, %v856
          %v875 = vpack.c.bf16 %v859, %v857
          %v876 = vld [vmem:[%s270] sm:$0xf]
          %v877 = vld [vmem:[%s270 + $0x4] sm:$0xf]
          %v878 = vld [vmem:[%s270 + $0x8] sm:$0xf]
          %v879 = vld [vmem:[%s270 + $0xc] sm:$0xf]
          %v880 = vld [vmem:[%s270 + $0x10] sm:$0xf]
          %v881 = vld [vmem:[%s270 + $0x14] sm:$0xf]
          %v882 = vld [vmem:[%s270 + $0x18] sm:$0xf]
          %v883 = vld [vmem:[%s270 + $0x1c] sm:$0xf]
          %v884 = vld [vmem:[%s270 + $0x20] sm:$0xf]
          %v885 = vld [vmem:[%s270 + $0x24] sm:$0xf]
          %v886 = vld [vmem:[%s270 + $0x28] sm:$0xf]
          %v887 = vld [vmem:[%s270 + $0x2c] sm:$0xf]
          %v888 = vld [vmem:[%s270 + $0x30] sm:$0xf]
          %v889 = vld [vmem:[%s270 + $0x34] sm:$0xf]
          %v890 = vld [vmem:[%s270 + $0x38] sm:$0xf]
          %v891 = vld [vmem:[%s270 + $0x3c] sm:$0xf]
          %v892 = vld [vmem:[%s270 + $0x40] sm:$0xf]
          %v893 = vld [vmem:[%s270 + $0x44] sm:$0xf]
          %v894 = vld [vmem:[%s270 + $0x48] sm:$0xf]
          %v895 = vld [vmem:[%s270 + $0x4c] sm:$0xf]
          %v896 = vld [vmem:[%s270 + $0x50] sm:$0xf]
          %v897 = vld [vmem:[%s270 + $0x54] sm:$0xf]
          %v898 = vld [vmem:[%s270 + $0x58] sm:$0xf]
          %v899 = vld [vmem:[%s270 + $0x5c] sm:$0xf]
          %v900 = vld [vmem:[%s270 + $0x60] sm:$0xf]
          %v901 = vld [vmem:[%s270 + $0x64] sm:$0xf]
          %v902 = vld [vmem:[%s270 + $0x68] sm:$0xf]
          %v903 = vld [vmem:[%s270 + $0x6c] sm:$0xf]
          %v904 = vld [vmem:[%s270 + $0x70] sm:$0xf]
          %v905 = vld [vmem:[%s270 + $0x74] sm:$0xf]
          %v906 = vld [vmem:[%s270 + $0x78] sm:$0xf]
          %v907 = vld [vmem:[%s270 + $0x7c] sm:$0xf]
          %v940 = vunpack.c.l.b16 %v876
          %v941 = vunpack.c.l.b16 %v877
          %v942 = vunpack.c.l.b16 %v878
          %v943 = vunpack.c.l.b16 %v879
          %v944 = vunpack.c.l.b16 %v880
          %v945 = vunpack.c.l.b16 %v881
          %v946 = vunpack.c.l.b16 %v882
          %v947 = vunpack.c.l.b16 %v883
          %v948 = vunpack.c.l.b16 %v884
          %v949 = vunpack.c.l.b16 %v885
          %v950 = vunpack.c.l.b16 %v886
          %v951 = vunpack.c.l.b16 %v887
          %v952 = vunpack.c.l.b16 %v888
          %v953 = vunpack.c.l.b16 %v889
          %v954 = vunpack.c.l.b16 %v890
          %v955 = vunpack.c.l.b16 %v891
          %v956 = vunpack.c.l.b16 %v892
          %v957 = vunpack.c.l.b16 %v893
          %v958 = vunpack.c.l.b16 %v894
          %v959 = vunpack.c.l.b16 %v895
          %v960 = vunpack.c.l.b16 %v896
          %v961 = vunpack.c.l.b16 %v897
          %v962 = vunpack.c.l.b16 %v898
          %v963 = vunpack.c.l.b16 %v899
          %v964 = vunpack.c.l.b16 %v900
          %v965 = vunpack.c.l.b16 %v901
          %v966 = vunpack.c.l.b16 %v902
          %v967 = vunpack.c.l.b16 %v903
          %v968 = vunpack.c.l.b16 %v904
          %v969 = vunpack.c.l.b16 %v905
          %v970 = vunpack.c.l.b16 %v906
          %v971 = vunpack.c.l.b16 %v907
          %v972 = vpack.c.b16 %v941, %v940
          %v973 = vpack.c.b16 %v943, %v942
          %v974 = vpack.c.b16 %v945, %v944
          %v975 = vpack.c.b16 %v947, %v946
          %v976 = vpack.c.b16 %v949, %v948
          %v977 = vpack.c.b16 %v951, %v950
          %v978 = vpack.c.b16 %v953, %v952
          %v979 = vpack.c.b16 %v955, %v954
          %v980 = vpack.c.b16 %v957, %v956
          %v981 = vpack.c.b16 %v959, %v958
          %v982 = vpack.c.b16 %v961, %v960
          %v983 = vpack.c.b16 %v963, %v962
          %v984 = vpack.c.b16 %v965, %v964
          %v985 = vpack.c.b16 %v967, %v966
          %v986 = vpack.c.b16 %v969, %v968
          %v987 = vpack.c.b16 %v971, %v970
          %1004 = vmatprep.subr.bf16.mxu0 0
          %1005 = vmatpush1.bf16.msra.mxu0 %v972
          %1006 = vmatprep.subr.bf16.mxu0 0
          %1007 = vmatpush1.bf16.msra.mxu0 %v973
          %1008 = vmatprep.subr.bf16.mxu0 0
          %1009 = vmatpush1.bf16.msra.mxu0 %v974
          %1010 = vmatprep.subr.bf16.mxu0 0
          %1011 = vmatpush1.bf16.msra.mxu0 %v975
          %1012 = vmatprep.subr.bf16.mxu0 0
          %1013 = vmatpush1.bf16.msra.mxu0 %v976
          %1014 = vmatprep.subr.bf16.mxu0 0
          %1015 = vmatpush1.bf16.msra.mxu0 %v977
          %1016 = vmatprep.subr.bf16.mxu0 0
          %1017 = vmatpush1.bf16.msra.mxu0 %v978
          %1018 = vmatprep.subr.bf16.mxu0 0
          %1019 = vmatpush1.bf16.msra.mxu0 %v979
          %1020 = vmatprep.subr.bf16.mxu0 0
          %1021 = vmatpush1.bf16.msra.mxu0 %v980
          %1022 = vmatprep.subr.bf16.mxu0 0
          %1023 = vmatpush1.bf16.msra.mxu0 %v981
          %1024 = vmatprep.subr.bf16.mxu0 0
          %1025 = vmatpush1.bf16.msra.mxu0 %v982
          %1026 = vmatprep.subr.bf16.mxu0 0
          %1027 = vmatpush1.bf16.msra.mxu0 %v983
          %1028 = vmatprep.subr.bf16.mxu0 0
          %1029 = vmatpush1.bf16.msra.mxu0 %v984
          %1030 = vmatprep.subr.bf16.mxu0 0
          %1031 = vmatpush1.bf16.msra.mxu0 %v985
          %1032 = vmatprep.subr.bf16.mxu0 0
          %1033 = vmatpush1.bf16.msra.mxu0 %v986
          %1034 = vmatprep.subr.bf16.mxu0 0
          %1035 = vmatpush1.bf16.msra.mxu0 %v987
          %1036 = vmatprep.mubr.bf16.mxu0 %v861
          %1037 = vmatmul.mubr.bf16.gmra.mrb[0].mxu0 %v860
          %v1038 = vpop.f32.mrb[0].mxu0
          %v1039 = vadd.f32 0.0, %v1038
          %v1040 = vpop.f32.mrb[0].mxu0
          %v1041 = vpop.f32.mrb[0].mxu0
          %v1042 = vadd.f32 0.0, %v1041
          %v1043 = vpop.f32.mrb[0].mxu0
          %1044 = vmatprep.mubr.bf16.mxu0 %v863
          %1045 = vmatmul.mubr.bf16.gmra.mrb[0].mxu0 %v862
          %v1046 = vpop.f32.mrb[0].mxu0
          %v1047 = vadd.f32 0.0, %v1046
          %v1048 = vpop.f32.mrb[0].mxu0
          %v1049 = vpop.f32.mrb[0].mxu0
          %v1050 = vadd.f32 0.0, %v1049
          %v1051 = vpop.f32.mrb[0].mxu0
          %1052 = vmatprep.mubr.bf16.mxu0 %v865
          %1053 = vmatmul.mubr.bf16.gmra.mrb[0].mxu0 %v864
          %v1054 = vpop.f32.mrb[0].mxu0
          %v1055 = vadd.f32 0.0, %v1054
          %v1056 = vpop.f32.mrb[0].mxu0
          %v1057 = vpop.f32.mrb[0].mxu0
          %v1058 = vadd.f32 0.0, %v1057
          %v1059 = vpop.f32.mrb[0].mxu0
          %1060 = vmatprep.mubr.bf16.mxu0 %v867
          %1061 = vmatmul.mubr.bf16.gmra.mrb[0].mxu0 %v866
          %v1062 = vpop.f32.mrb[0].mxu0
          %v1063 = vadd.f32 0.0, %v1062
          %v1064 = vpop.f32.mrb[0].mxu0
          %v1065 = vpop.f32.mrb[0].mxu0
          %v1066 = vadd.f32 0.0, %v1065
          %v1067 = vpop.f32.mrb[0].mxu0
          %1068 = vmatprep.mubr.bf16.mxu0 %v869
          %1069 = vmatmul.mubr.bf16.gmra.mrb[0].mxu0 %v868
          %v1070 = vpop.f32.mrb[0].mxu0
          %v1071 = vadd.f32 0.0, %v1070
          %v1072 = vpop.f32.mrb[0].mxu0
          %v1073 = vpop.f32.mrb[0].mxu0
          %v1074 = vadd.f32 0.0, %v1073
          %v1075 = vpop.f32.mrb[0].mxu0
          %1076 = vmatprep.mubr.bf16.mxu0 %v871
          %1077 = vmatmul.mubr.bf16.gmra.mrb[0].mxu0 %v870
          %v1078 = vpop.f32.mrb[0].mxu0
          %v1079 = vadd.f32 0.0, %v1078
          %v1080 = vpop.f32.mrb[0].mxu0
          %v1081 = vpop.f32.mrb[0].mxu0
          %v1082 = vadd.f32 0.0, %v1081
          %v1083 = vpop.f32.mrb[0].mxu0
          %1084 = vmatprep.mubr.bf16.mxu0 %v873
          %1085 = vmatmul.mubr.bf16.gmra.mrb[0].mxu0 %v872
          %v1086 = vpop.f32.mrb[0].mxu0
          %v1087 = vadd.f32 0.0, %v1086
          %v1088 = vpop.f32.mrb[0].mxu0
          %v1089 = vpop.f32.mrb[0].mxu0
          %v1090 = vadd.f32 0.0, %v1089
          %v1091 = vpop.f32.mrb[0].mxu0
          %1092 = vmatprep.mubr.bf16.mxu0 %v875
          %1093 = vmatmul.mubr.bf16.gmra.mrb[0].mxu0 %v874
          %v1094 = vpop.f32.mrb[0].mxu0
          %v1095 = vadd.f32 0.0, %v1094
          %v1096 = vpop.f32.mrb[0].mxu0
          %v1097 = vpop.f32.mrb[0].mxu0
          %v1098 = vadd.f32 0.0, %v1097
          %v1099 = vpop.f32.mrb[0].mxu0
          %1100 = vdwg.mxu0
          %s1101 = smul.u32 %s30, 128
          %s1102 = smul.u32 %s382, 256
          %s1103 = sadd.s32 %s1102, %s1101
          %s1104 = scalar_lea.vmem [#allocation2], %s1103
          %v1105 = vld [vmem:[%s1104] sm:$0xff]
          %v1106 = vld [vmem:[%s1104 + $0x8] sm:$0xff]
          %v1107 = vld [vmem:[%s1104 + $0x10] sm:$0xff]
          %v1108 = vld [vmem:[%s1104 + $0x18] sm:$0xff]
          %v1109 = vld [vmem:[%s1104 + $0x20] sm:$0xff]
          %v1110 = vld [vmem:[%s1104 + $0x28] sm:$0xff]
          %v1111 = vld [vmem:[%s1104 + $0x30] sm:$0xff]
          %v1112 = vld [vmem:[%s1104 + $0x38] sm:$0xff]
          %v1113 = vld [vmem:[%s1104 + $0x40] sm:$0xff]
          %v1114 = vld [vmem:[%s1104 + $0x48] sm:$0xff]
          %v1115 = vld [vmem:[%s1104 + $0x50] sm:$0xff]
          %v1116 = vld [vmem:[%s1104 + $0x58] sm:$0xff]
          %v1117 = vld [vmem:[%s1104 + $0x60] sm:$0xff]
          %v1118 = vld [vmem:[%s1104 + $0x68] sm:$0xff]
          %v1119 = vld [vmem:[%s1104 + $0x70] sm:$0xff]
          %v1120 = vld [vmem:[%s1104 + $0x78] sm:$0xff]
          %v1121 = vmax.f32 %v1039, 0.0
          %v1122 = vmax.f32 %v1042, 0.0
          %v1123 = vmax.f32 %v1047, 0.0
          %v1124 = vmax.f32 %v1050, 0.0
          %v1125 = vmax.f32 %v1055, 0.0
          %v1126 = vmax.f32 %v1058, 0.0
          %v1127 = vmax.f32 %v1063, 0.0
          %v1128 = vmax.f32 %v1066, 0.0
          %v1129 = vmax.f32 %v1071, 0.0
          %v1130 = vmax.f32 %v1074, 0.0
          %v1131 = vmax.f32 %v1079, 0.0
          %v1132 = vmax.f32 %v1082, 0.0
          %v1133 = vmax.f32 %v1087, 0.0
          %v1134 = vmax.f32 %v1090, 0.0
          %v1135 = vmax.f32 %v1095, 0.0
          %v1136 = vmax.f32 %v1098, 0.0
          %v1137 = vadd.f32 %v1105, %v1121
          %v1138 = vadd.f32 %v1106, %v1122
          %v1139 = vadd.f32 %v1107, %v1123
          %v1140 = vadd.f32 %v1108, %v1124
          %v1141 = vadd.f32 %v1109, %v1125
          %v1142 = vadd.f32 %v1110, %v1126
          %v1143 = vadd.f32 %v1111, %v1127
          %v1144 = vadd.f32 %v1112, %v1128
          %v1145 = vadd.f32 %v1113, %v1129
          %v1146 = vadd.f32 %v1114, %v1130
          %v1147 = vadd.f32 %v1115, %v1131
          %v1148 = vadd.f32 %v1116, %v1132
          %v1149 = vadd.f32 %v1117, %v1133
          %v1150 = vadd.f32 %v1118, %v1134
          %v1151 = vadd.f32 %v1119, %v1135
          %v1152 = vadd.f32 %v1120, %v1136
          %s1153 = smul.u32 %s389, 256
          %s1154 = sadd.s32 %s1153, %s1101
          %s1155 = scalar_lea.vmem [#allocation2], %s1154
          %1156 = vst [vmem:[%s1155] sm:$0xff] %v1137
          %1157 = vst [vmem:[%s1155 + $0x8] sm:$0xff] %v1138
          %1158 = vst [vmem:[%s1155 + $0x10] sm:$0xff] %v1139
          %1159 = vst [vmem:[%s1155 + $0x18] sm:$0xff] %v1140
          %1160 = vst [vmem:[%s1155 + $0x20] sm:$0xff] %v1141
          %1161 = vst [vmem:[%s1155 + $0x28] sm:$0xff] %v1142
          %1162 = vst [vmem:[%s1155 + $0x30] sm:$0xff] %v1143
          %1163 = vst [vmem:[%s1155 + $0x38] sm:$0xff] %v1144
          %1164 = vst [vmem:[%s1155 + $0x40] sm:$0xff] %v1145
          %1165 = vst [vmem:[%s1155 + $0x48] sm:$0xff] %v1146
          %1166 = vst [vmem:[%s1155 + $0x50] sm:$0xff] %v1147
          %1167 = vst [vmem:[%s1155 + $0x58] sm:$0xff] %v1148
          %1168 = vst [vmem:[%s1155 + $0x60] sm:$0xff] %v1149
          %1169 = vst [vmem:[%s1155 + $0x68] sm:$0xff] %v1150
          %1170 = vst [vmem:[%s1155 + $0x70] sm:$0xff] %v1151
          %1171 = vst [vmem:[%s1155 + $0x78] sm:$0xff] %v1152
          %v1172 = vpack.c.bf16 %v1138, %v1137
          %v1173 = vpack.c.bf16 %v1140, %v1139
          %v1174 = vpack.c.bf16 %v1142, %v1141
          %v1175 = vpack.c.bf16 %v1144, %v1143
          %v1176 = vpack.c.bf16 %v1146, %v1145
          %v1177 = vpack.c.bf16 %v1148, %v1147
          %v1178 = vpack.c.bf16 %v1150, %v1149
          %v1179 = vpack.c.bf16 %v1152, %v1151
          %s1180 = smul.u32 %s403, 256
          %s1181 = sadd.s32 %s1180, %s1101
          %s1182 = sshra.s32 %s1181, 4
          %s1183 = sand.u32 %s1181, 15
          %s1184 = smul.addr %s1182, 8
          %s1185 = scalar_lea.vmem [#allocation3], %s1184
          %1186 = vst [vmem:[%s1185] sm:$0xff] %v1172
          %1187 = vst [vmem:[%s1185 + $0x8] sm:$0xff] %v1173
          %1188 = vst [vmem:[%s1185 + $0x10] sm:$0xff] %v1174
          %1189 = vst [vmem:[%s1185 + $0x18] sm:$0xff] %v1175
          %1190 = vst [vmem:[%s1185 + $0x20] sm:$0xff] %v1176
          %1191 = vst [vmem:[%s1185 + $0x28] sm:$0xff] %v1177
          %1192 = vst [vmem:[%s1185 + $0x30] sm:$0xff] %v1178
          %1193 = vst [vmem:[%s1185 + $0x38] sm:$0xff] %v1179
          %1194 = vst [vmem:[%s302] sm:$0xff] %v1137
          %1195 = vst [vmem:[%s302 + $0x8] sm:$0xff] %v1138
          %1196 = vst [vmem:[%s302 + $0x10] sm:$0xff] %v1139
          %1197 = vst [vmem:[%s302 + $0x18] sm:$0xff] %v1140
          %1198 = vst [vmem:[%s302 + $0x20] sm:$0xff] %v1141
          %1199 = vst [vmem:[%s302 + $0x28] sm:$0xff] %v1142
          %1200 = vst [vmem:[%s302 + $0x30] sm:$0xff] %v1143
          %1201 = vst [vmem:[%s302 + $0x38] sm:$0xff] %v1144
          %1202 = vst [vmem:[%s302 + $0x40] sm:$0xff] %v1145
          %1203 = vst [vmem:[%s302 + $0x48] sm:$0xff] %v1146
          %1204 = vst [vmem:[%s302 + $0x50] sm:$0xff] %v1147
          %1205 = vst [vmem:[%s302 + $0x58] sm:$0xff] %v1148
          %1206 = vst [vmem:[%s302 + $0x60] sm:$0xff] %v1149
          %1207 = vst [vmem:[%s302 + $0x68] sm:$0xff] %v1150
          %1208 = vst [vmem:[%s302 + $0x70] sm:$0xff] %v1151
          %1209 = vst [vmem:[%s302 + $0x78] sm:$0xff] %v1152
        $region88: #{tpu_custom_call.1} parent=31 // pred_fallthru
          _
        %s1210 = sand.u32 %s139, 1
        %s1211 = scalar_lea.sflag [#allocation7], %s1210
        %s1212 = sand.u32 %s139, 1
        %s1213 = smul.addr %s1212, 128
        %s1214 = scalar_lea.vmem [#allocation11], %s1213
        // Predicated region
        $region89: #{tpu_custom_call.1} parent=31 // pred_check
          %p1215 = pneg %p149
        $region90: #{tpu_custom_call.1} parent=31 // pred_check_branch
          %1217 = sbr.rel (%p1215) target = $region92
        $region91: #{tpu_custom_call.1} parent=31 // pred_region
          %s1218 = smul.u32 16, %s30
          %s1220 = ssub.s32 2048, 2048
          %1221 = vsyncadd %s1211, %s1220
          %s1222 = smul.addr %s1218, 128
          %s1223 = scalar_lea.hbm %s4, %s1222
          %s1224 = sshll.u32 %s1214, 4
          %s1225 = int_to_ptr.vmem [resolvable:$true] %s1224
          %1230 = dma.vmem_to_hbm [thread:$0]  %s1225, 2048, %s1223, %s1211, 128, 128, 8
        $region92: #{tpu_custom_call.1} parent=31 // pred_fallthru
          _
      $region32: #{tpu_custom_call.1} parent=5 // pred_fallthru
        _
      %p1231 = scmp.le.s32.totalorder 2, %s19
      // Predicated region
      $region93: #{tpu_custom_call.1} parent=5 // pred_check
        %p1232 = pneg %p1231
      $region94: #{tpu_custom_call.1} parent=5 // pred_check_branch
        %1234 = sbr.rel (%p1232) target = $region96
      $region95: #{tpu_custom_call.1} parent=5 // pred_region
        %s1235 = ssub.s32 %s19, 2
        // Predicated region
        $region97: #{tpu_custom_call.1} parent=95 // pred_check
          %p1236 = pneg %p155
        $region98: #{tpu_custom_call.1} parent=95 // pred_check_branch
          %1238 = sbr.rel (%p1236) target = $region100
        $region99: #{tpu_custom_call.1} parent=95 // pred_region
          %s1239 = sand.u32 %s140, 1
          %s1240 = scalar_lea.sflag [#allocation7], %s1239
          %s1241 = sand.u32 %s140, 1
          %s1242 = smul.addr %s1241, 128
          %s1243 = scalar_lea.vmem [#allocation11], %s1242
          %1244 = dma.done %s1240, 2048
        $region100: #{tpu_custom_call.1} parent=95 // pred_fallthru
          _
      $region96: #{tpu_custom_call.1} parent=5 // pred_fallthru
        _
    $region6: #{tpu_custom_call.1} parent=1 // loop_footer
      %s23 = sadd.s32 1, %s19
    $region7: #{tpu_custom_call.1} parent=1 // loop_footer_branch
      %18 = sbr.rel target = $region3
    $region8: #{tpu_custom_call.1} parent=1 // loop_exit
      _
    %1245 = vsyncpa [#allocation6], 1
    %s1246 = scalar_lea.sflag [#allocation6], 1
    %1247 = vsyncpa %s1246, 1
    %1248 = vsyncpa [#allocation9], 1
    %s1249 = scalar_lea.sflag [#allocation9], 1
    %1250 = vsyncpa %s1249, 1
    %1251 = vsyncpa [#allocation7], 1
    %s1252 = scalar_lea.sflag [#allocation7], 1
    %1253 = vsyncpa %s1252, 1

</llo_original>
